<compile_context>
chip_gen: v5e
topology: v5e:2x2
jax: 0.10.0
libtpu: 0.0.40
codegen_flags: <defaults>
</compile_context>

<pallas_src>
import numpy as np
import jax
import jax.numpy as jnp
from jax.experimental import pallas as pl
from jax.experimental.pallas import tpu as pltpu

EPS = 1e-5
COMPUTE_DTYPE = jnp.bfloat16      # matmul-operand dtype (f32 accumulation everywhere)
VMEM_LIMIT = 48 * 1024 * 1024


# ----------------------------------------------------------------------------- kernels
def matmul_bias_kernel(x_ref, w_ref, b_ref, o_ref):
    # x: (1, K, M), w: (N, K), b: (N, 1)  ->  o: (1, N, M)
    y = jnp.dot(w_ref[...], x_ref[0], preferred_element_type=jnp.float32) + b_ref[...]
    o_ref[0] = y.astype(o_ref.dtype)


def conv_bn_relu_kernel(taps_ref, w_ref, sc_ref, sh_ref, o_ref):
    # 3x3 conv as ONE wide-K dot over 9 channel-stacked taps, + folded BN + ReLU.
    # taps: (1, 9*Cin, T), w: (Cout, 9*Cin), sc/sh: (Cout, 1)  ->  o: (1, Cout, T)
    acc = jnp.dot(w_ref[...], taps_ref[0], preferred_element_type=jnp.float32)
    o_ref[0] = jnp.maximum(acc * sc_ref[...] + sh_ref[...], 0.0).astype(o_ref.dtype)


def fused_tail_kernel(taps_ref, c1_ref, w2_ref, sc2_ref, sh2_ref,
                      w1c_ref, b1c_ref, w2c_ref, b2c_ref,
                      wqk_ref, sqk_ref, tqk_ref, wq2_ref, sq2_ref, tq2_ref,
                      wv_ref, sv_ref, tv_ref, ws_ref, ss_ref, ts_ref,
                      o_ref):
    """conv2 + residual + Channelatt + Spaceatt for one batch, fully resident in VMEM."""
    f32 = jnp.float32
    cdt = taps_ref.dtype
    ch = wv_ref.shape[0]                                   # Cout // 2

    # --- En_blocks tail: conv2 = relu(bn(3x3(conv1))); point = conv1 + conv2 ---
    conv2 = jnp.dot(w2_ref[...], taps_ref[0], preferred_element_type=f32)
    conv2 = jnp.maximum(conv2 * sc2_ref[...] + sh2_ref[...], 0.0)
    point = c1_ref[0].astype(f32) + conv2                  # (Cout, HW), stays in VMEM

    # --- Channelatt (SE): global mean over lanes + two tiny FCs; catt stays in VMEM ---
    gp = jnp.mean(point, axis=-1, keepdims=True)           # (Cout, 1)
    h = jnp.maximum(
        jnp.dot(w1c_ref[...], gp, preferred_element_type=f32) + b1c_ref[...], 0.0)
    se = jax.nn.sigmoid(
        jnp.dot(w2c_ref[...], h, preferred_element_type=f32) + b2c_ref[...])   # (Cout, 1)
    catt = point * se                                      # (Cout, HW)

    # --- Spaceatt: fused Q1/K projection, VPU reduce for the 1-channel Q, V on catt ---
    point_c = point.astype(cdt)
    qk = jnp.dot(wqk_ref[...], point_c, preferred_element_type=f32)
    qk = qk * sqk_ref[...] + tqk_ref[...]                  # (2*Ch, HW)
    q1, k = qk[:ch], qk[ch:]
    q = jnp.sum(q1 * wq2_ref[...], axis=0, keepdims=True)  # (1, HW): VPU + sublane reduce
    q = q * sq2_ref[...] + tq2_ref[...]
    v = jnp.dot(wv_ref[...], catt.astype(cdt), preferred_element_type=f32)
    v = v * sv_ref[...] + tv_ref[...]                      # (Ch, HW)
    att = q * k + v
    out = jnp.dot(ws_ref[...], att.astype(cdt), preferred_element_type=f32)
    o_ref[0] = jnp.maximum(out * ss_ref[...] + ts_ref[...], 0.0).astype(o_ref.dtype)


# ------------------------------------------------------------------------- pallas wrappers
def _bcast_spec(arr, grid_rank):
    zeros = (0,) * arr.ndim
    if grid_rank == 1:
        return pl.BlockSpec(arr.shape, lambda b: zeros)
    return pl.BlockSpec(arr.shape, lambda b, t: zeros)


def _pick_lane_tile(hw, max_tile=2048):
    """Largest multiple of 128 (<= max_tile) that divides hw; else the full extent."""
    if hw % 128 != 0:
        return hw
    best, t = 128, 256
    while t <= min(hw, max_tile):
        if hw % t == 0:
            best = t
        t += 128
    return best


def _cparams(semantics):
    return pltpu.CompilerParams(dimension_semantics=semantics,
                                vmem_limit_bytes=VMEM_LIMIT)


def matmul_bias(x, w, b, out_dtype):
    B, K, M = x.shape
    N = w.shape[0]
    return pl.pallas_call(
        matmul_bias_kernel,
        out_shape=jax.ShapeDtypeStruct((B, N, M), out_dtype),
        grid=(B,),
        in_specs=[pl.BlockSpec((1, K, M), lambda bi: (bi, 0, 0)),
                  _bcast_spec(w, 1), _bcast_spec(b, 1)],
        out_specs=pl.BlockSpec((1, N, M), lambda bi: (bi, 0, 0)),
        compiler_params=_cparams(("parallel",)),
    )(x, w, b)


def conv3x3_bn_relu(taps, w, scale, shift, out_dtype):
    B, K, HW = taps.shape
    Cout = w.shape[0]
    tile = _pick_lane_tile(HW)
    return pl.pallas_call(
        conv_bn_relu_kernel,
        out_shape=jax.ShapeDtypeStruct((B, Cout, HW), out_dtype),
        grid=(B, HW // tile),
        in_specs=[pl.BlockSpec((1, K, tile), lambda b, t: (b, 0, t)),
                  _bcast_spec(w, 2), _bcast_spec(scale, 2), _bcast_spec(shift, 2)],
        out_specs=pl.BlockSpec((1, Cout, tile), lambda b, t: (b, 0, t)),
        compiler_params=_cparams(("parallel", "parallel")),
    )(taps, w, scale, shift)


def fused_tail(taps2, conv1, params):
    B, K2, HW = taps2.shape
    Cout = conv1.shape[1]
    in_specs = ([pl.BlockSpec((1, K2, HW), lambda b: (b, 0, 0)),
                 pl.BlockSpec((1, Cout, HW), lambda b: (b, 0, 0))]
                + [_bcast_spec(p, 1) for p in params])
    return pl.pallas_call(
        fused_tail_kernel,
        out_shape=jax.ShapeDtypeStruct((B, Cout, HW), jnp.float32),
        grid=(B,),
        in_specs=in_specs,
        out_specs=pl.BlockSpec((1, Cout, HW), lambda b: (b, 0, 0)),
        compiler_params=_cparams(("parallel",)),
    )(taps2, conv1, *params)


# ----------------------------------------------------------------------------- glue
def fold_bn(bias, gamma, beta, mean, var, eps=EPS):
    """Fold conv bias + inference BatchNorm into y = conv*scale + shift (column vectors)."""
    scale = gamma / jnp.sqrt(var + eps)
    shift = (bias - mean) * scale + beta
    return scale.reshape(-1, 1), shift.reshape(-1, 1)


def build_taps(x_nchw):
    """(B, C, H, W) -> (B, 9*C, H*W): channel-stacked zero-padded 3x3 shift taps."""
    B, C, H, W = x_nchw.shape
    xp = jnp.pad(x_nchw, ((0, 0), (0, 0), (1, 1), (1, 1)))
    taps = [xp[:, :, di:di + H, dj:dj + W].reshape(B, C, H * W)
            for di in range(3) for dj in range(3)]
    return jnp.concatenate(taps, axis=1)


def conv3x3_weight(w_oihw, dtype):
    """(Cout, Cin, 3, 3) -> (Cout, 9*Cin), K ordered (tap, cin) to match build_taps."""
    Cout, Cin = w_oihw.shape[:2]
    return jnp.transpose(w_oihw, (0, 2, 3, 1)).reshape(Cout, 9 * Cin).astype(dtype)


def attnblock_forward(high_nchw, low_nchw, p, compute_dtype=COMPUTE_DTYPE):
    cdt = compute_dtype
    B, Cin, Hh, Wh = high_nchw.shape
    H, W = 2 * Hh, 2 * Wh
    Cout = p['Wt'].shape[1]

    # --- ConvTranspose2d(Cin, Cout, 2, stride=2): one matmul + tiny pixel shuffle ---
    wt = jnp.transpose(p['Wt'], (1, 2, 3, 0)).reshape(4 * Cout, Cin).astype(cdt)
    bt = jnp.repeat(p['bt'], 4).reshape(4 * Cout, 1)
    up_flat = matmul_bias(high_nchw.reshape(B, Cin, Hh * Wh).astype(cdt), wt, bt, cdt)
    up = (up_flat.reshape(B, Cout, 2, 2, Hh, Wh)
          .transpose(0, 1, 4, 2, 5, 3)
          .reshape(B, Cout, H, W))

    concat = jnp.concatenate([up, low_nchw.astype(cdt)], axis=1)     # (B, Cin, H, W)

    # --- En_blocks conv1: relu(bn(3x3 conv)) as one wide-K dot, tiled over (B, HW) ---
    sc1, sh1 = fold_bn(p['b1'], *p['bn1'])
    conv1 = conv3x3_bn_relu(build_taps(concat), conv3x3_weight(p['W1'], cdt),
                            sc1, sh1, cdt)                           # (B, Cout, HW)

    # --- fused tail: conv2 + residual + Channelatt + Spaceatt (one kernel) ---
    sc2, sh2 = fold_bn(p['b2'], *p['bn2'])
    w2 = conv3x3_weight(p['W2'], cdt)

    # Channelatt: 3x3 convs on a 1x1 (gpool) map == center tap only.
    w1c = p['Wc1'][:, :, 1, 1]
    w2c = p['Wc2'][:, :, 1, 1]
    b1c = p['bc1'].reshape(-1, 1)
    b2c = p['bc2'].reshape(-1, 1)

    # Spaceatt: all 1x1 convs with BN folded; Q1/K weights fused horizontally.
    wq1 = p['Wq1'][:, :, 0, 0]
    wk = p['Wk'][:, :, 0, 0]
    sq1, tq1 = fold_bn(p['bq1'], *p['bnq1'])
    sk, tk = fold_bn(p['bk'], *p['bnk'])
    wqk = jnp.concatenate([wq1, wk], axis=0).astype(cdt)             # (2*Ch, Cout)
    sqk = jnp.concatenate([sq1, sk], axis=0)
    tqk = jnp.concatenate([tq1, tk], axis=0)

    wq2 = jnp.transpose(p['Wq2'][:, :, 0, 0], (1, 0))                # (Ch, 1), used on VPU
    sq2, tq2 = fold_bn(p['bq2'], *p['bnq2'])                         # (1, 1)
    wv = p['Wv'][:, :, 0, 0].astype(cdt)                             # (Ch, Cout)
    sv, tv = fold_bn(p['bv'], *p['bnv'])
    ws = p['Ws'][:, :, 0, 0].astype(cdt)                             # (Cout, Ch)
    ss, ts = fold_bn(p['bs'], *p['bns'])

    taps2 = build_taps(conv1.reshape(B, Cout, H, W))                 # (B, 9*Cout, HW)
    out = fused_tail(taps2, conv1,
                     (w2, sc2, sh2, w1c, b1c, w2c, b2c,
                      wqk, sqk, tqk, wq2, sq2, tq2, wv, sv, tv, ws, ss, ts))
    return out.reshape(B, Cout, H, W)                                # already NCHW


# ----------------------------------------------------------------------------- reference
def _bn_ref(x, gamma, beta, mean, var, eps=EPS):
    return gamma * (x - mean) / jnp.sqrt(var + eps) + beta


def reference_forward(high_nchw, low_nchw, p):
    high = jnp.transpose(high_nchw, (0, 2, 3, 1))
    low = jnp.transpose(low_nchw, (0, 2, 3, 1))
    B, Hh, Wh, _ = high.shape
    Cout = p['Wt'].shape[1]

    t = jnp.einsum('bijc,cokl->bikjlo', high, p['Wt'])
    up = t.reshape(B, 2 * Hh, 2 * Wh, Cout) + p['bt']
    concat = jnp.concatenate([up, low], axis=-1)

    def conv3(x, Wp, b):
        w = jnp.transpose(Wp, (2, 3, 1, 0))
        y = jax.lax.conv_general_dilated(x, w, (1, 1), 'SAME',
                                         dimension_numbers=('NHWC', 'HWIO', 'NHWC'))
        return y + b

    def conv1(x, Wp, b):
        return jnp.einsum('bhwc,oc->bhwo', x, Wp[:, :, 0, 0]) + b

    c1 = jax.nn.relu(_bn_ref(conv3(concat, p['W1'], p['b1']), *p['bn1']))
    c2 = jax.nn.relu(_bn_ref(conv3(c1, p['W2'], p['b2']), *p['bn2']))
    point = c1 + c2

    gp = jnp.mean(point, axis=(1, 2), keepdims=True)
    se = jax.nn.sigmoid(conv3(jax.nn.relu(conv3(gp, p['Wc1'], p['bc1'])), p['Wc2'], p['bc2']))
    catt = point * se

    Q = _bn_ref(conv1(_bn_ref(conv1(point, p['Wq1'], p['bq1']), *p['bnq1']),
                      p['Wq2'], p['bq2']), *p['bnq2'])
    K = _bn_ref(conv1(point, p['Wk'], p['bk']), *p['bnk'])
    V = _bn_ref(conv1(catt, p['Wv'], p['bv']), *p['bnv'])
    att = Q * K + V
    out = jax.nn.relu(_bn_ref(conv1(att, p['Ws'], p['bs']), *p['bns']))
    return jnp.transpose(out, (0, 3, 1, 2))


# ----------------------------------------------------------------------------- params
def init_params(key, in_channel, out_channel):
    keys = iter(jax.random.split(key, 64))
    W = lambda shape, s=0.3: s * jax.random.normal(next(keys), shape, jnp.float32)

    def bn(c):
        return (1.0 + 0.1 * jax.random.normal(next(keys), (c,), jnp.float32),
                0.1 * jax.random.normal(next(keys), (c,), jnp.float32),
                0.1 * jax.random.normal(next(keys), (c,), jnp.float32),
                jax.random.uniform(next(keys), (c,), jnp.float32, 0.5, 1.5))

    C, Ch = out_channel, out_channel // 2
    return dict(
        # ConvTranspose2d(in, out, 2, stride=2)   weight: (Cin, Cout, 2, 2)
        Wt=W((in_channel, C, 2, 2)), bt=W((C,)),
        # En_blocks
        W1=W((C, in_channel, 3, 3)), b1=W((C,)), bn1=bn(C),
        W2=W((C, C, 3, 3)), b2=W((C,)), bn2=bn(C),
        # Channelatt
        Wc1=W((Ch, C, 3, 3)), bc1=W((Ch,)),
        Wc2=W((C, Ch, 3, 3)), bc2=W((C,)),
        # Spaceatt
        Wq1=W((Ch, C, 1, 1)), bq1=W((Ch,)), bnq1=bn(Ch),
        Wq2=W((1, Ch, 1, 1)), bq2=W((1,)), bnq2=bn(1),
        Wk=W((Ch, C, 1, 1)), bk=W((Ch,)), bnk=bn(Ch),
        Wv=W((Ch, C, 1, 1)), bv=W((Ch,)), bnv=bn(Ch),
        Ws=W((C, Ch, 1, 1)), bs=W((C,)), bns=bn(C),
    )


# ----------------------------------------------------------------------------- main
if __name__ == "__main__":
    B, in_channel, out_channel = 2, 8, 4
    Hh = Wh = 8                      # "high" spatial; upsampled 2x -> 16x16 (HW = 256 lanes)
    H = W = 2 * Hh

    key = jax.random.PRNGKey(0)
    k_high, k_low, k_par = jax.random.split(key, 3)
    high = jax.random.normal(k_high, (B, in_channel, Hh, Wh), jnp.float32)            # NCHW
    low = jax.random.normal(k_low, (B, in_channel - out_channel, H, W), jnp.float32)   # NCHW
    params = init_params(k_par, in_channel, out_channel)

    out = jax.jit(attnblock_forward)(high, low, params)
    jax.block_until_ready(out)
    assert out.shape == (B, out_channel, H, W)

    ref = reference_forward(high, low, params)
    # bf16 matmul operands vs. an all-f32 XLA reference -> bf16-appropriate tolerance.
    np.testing.assert_allclose(np.asarray(out, np.float32), np.asarray(ref),
                               rtol=5e-2, atol=5e-2)

    print("KERNEL_OK")
</pallas_src>

<mosaic_0001>
module attributes {stable_mosaic.version = 11 : i64} {
  func.func @matmul_bias_kernel(%arg0: i32, %arg1: memref<1x8x64xbf16, #tpu.memory_space<vmem>>, %arg2: memref<16x8xbf16, #tpu.memory_space<vmem>>, %arg3: memref<16x1xf32, #tpu.memory_space<vmem>>, %arg4: memref<1x16x64xbf16, #tpu.memory_space<vmem>>) attributes {dimension_semantics = [#tpu.dimension_semantics<parallel>], iteration_bounds = array<i64: 2>, scalar_prefetch = 0 : i64, scratch_operands = 0 : i64, tpu.core_type = #tpu.core_type<tc>, window_params = [{transform_indices = @transform_0, window_bounds = array<i64: 1, 8, 64>}, {pipeline_mode = #tpu.pipeline_mode<synchronous>, transform_indices = @transform_1, window_bounds = array<i64: 16, 8>}, {pipeline_mode = #tpu.pipeline_mode<synchronous>, transform_indices = @transform_2, window_bounds = array<i64: 16, 1>}, {transform_indices = @transform_3, window_bounds = array<i64: 1, 16, 64>}]} {
    %c0 = arith.constant 0 : index
    %c0_0 = arith.constant 0 : index
    %0 = vector.load %arg2[%c0, %c0_0] : memref<16x8xbf16, #tpu.memory_space<vmem>>, vector<16x8xbf16>
    %c0_1 = arith.constant 0 : index
    %c0_2 = arith.constant 0 : index
    %c0_3 = arith.constant 0 : index
    %1 = vector.load %arg1[%c0_1, %c0_2, %c0_3] : memref<1x8x64xbf16, #tpu.memory_space<vmem>>, vector<1x8x64xbf16>
    %2 = vector.shape_cast %1 : vector<1x8x64xbf16> to vector<8x64xbf16>
    %cst = arith.constant dense<0.000000e+00> : vector<16x64xf32>
    %3 = tpu.matmul %0, %2, %cst {dimension_numbers = #tpu.dot_dimension_numbers<[1], [0], [0], [1], [0, 0, 1, 1], [], []>} : vector<16x8xbf16>, vector<8x64xbf16>, vector<16x64xf32> -> vector<16x64xf32>
    %c0_4 = arith.constant 0 : index
    %c0_5 = arith.constant 0 : index
    %4 = vector.load %arg3[%c0_4, %c0_5] : memref<16x1xf32, #tpu.memory_space<vmem>>, vector<16x1xf32>
    %5 = vector.broadcast %4 : vector<16x1xf32> to vector<16x64xf32>
    %6 = arith.addf %3, %5 : vector<16x64xf32>
    %7 = arith.truncf %6 : vector<16x64xf32> to vector<16x64xbf16>
    %c0_6 = arith.constant 0 : index
    %c0_7 = arith.constant 0 : index
    %c0_8 = arith.constant 0 : index
    %8 = vector.load %arg4[%c0_6, %c0_7, %c0_8] : memref<1x16x64xbf16, #tpu.memory_space<vmem>>, vector<1x16x64xbf16>
    %9 = vector.shape_cast %8 : vector<1x16x64xbf16> to vector<16x64xbf16>
    %10 = vector.shape_cast %7 : vector<16x64xbf16> to vector<1x16x64xbf16>
    tpu.vector_store %arg4[%c0_6, %c0_7, %c0_8], %10 {strides = array<i32>} : memref<1x16x64xbf16, #tpu.memory_space<vmem>>, vector<1x16x64xbf16>,
    return
  }
  func.func @transform_0(%arg0: i32) -> (i32, i32, i32) {
    %c0_i32 = arith.constant 0 : i32
    %c0_i32_0 = arith.constant 0 : i32
    %c0_i32_1 = arith.constant 0 : i32
    return %arg0, %c0_i32, %c0_i32_0 : i32, i32, i32
  }
  func.func @transform_1(%arg0: i32) -> (i32, i32) {
    %c0_i32 = arith.constant 0 : i32
    %c0_i32_0 = arith.constant 0 : i32
    %c0_i32_1 = arith.constant 0 : i32
    return %c0_i32, %c0_i32_0 : i32, i32
  }
  func.func @transform_2(%arg0: i32) -> (i32, i32) {
    %c0_i32 = arith.constant 0 : i32
    %c0_i32_0 = arith.constant 0 : i32
    %c0_i32_1 = arith.constant 0 : i32
    return %c0_i32, %c0_i32_0 : i32, i32
  }
  func.func @transform_3(%arg0: i32) -> (i32, i32, i32) {
    %c0_i32 = arith.constant 0 : i32
    %c0_i32_0 = arith.constant 0 : i32
    %c0_i32_1 = arith.constant 0 : i32
    return %arg0, %c0_i32, %c0_i32_0 : i32, i32, i32
  }
}

module attributes {stable_mosaic.version = 11 : i64} {
  func.func @conv_bn_relu_kernel(%arg0: i32, %arg1: i32, %arg2: memref<1x72x256xbf16, #tpu.memory_space<vmem>>, %arg3: memref<4x72xbf16, #tpu.memory_space<vmem>>, %arg4: memref<4x1xf32, #tpu.memory_space<vmem>>, %arg5: memref<4x1xf32, #tpu.memory_space<vmem>>, %arg6: memref<1x4x256xbf16, #tpu.memory_space<vmem>>) attributes {dimension_semantics = [#tpu.dimension_semantics<parallel>, #tpu.dimension_semantics<parallel>], iteration_bounds = array<i64: 2, 1>, scalar_prefetch = 0 : i64, scratch_operands = 0 : i64, tpu.core_type = #tpu.core_type<tc>, window_params = [{transform_indices = @transform_0, window_bounds = array<i64: 1, 72, 256>}, {pipeline_mode = #tpu.pipeline_mode<synchronous>, transform_indices = @transform_1, window_bounds = array<i64: 4, 72>}, {pipeline_mode = #tpu.pipeline_mode<synchronous>, transform_indices = @transform_2, window_bounds = array<i64: 4, 1>}, {pipeline_mode = #tpu.pipeline_mode<synchronous>, transform_indices = @transform_3, window_bounds = array<i64: 4, 1>}, {transform_indices = @transform_4, window_bounds = array<i64: 1, 4, 256>}]} {
    %c0 = arith.constant 0 : index
    %c0_0 = arith.constant 0 : index
    %0 = vector.load %arg3[%c0, %c0_0] : memref<4x72xbf16, #tpu.memory_space<vmem>>, vector<4x72xbf16>
    %c0_1 = arith.constant 0 : index
    %c0_2 = arith.constant 0 : index
    %c0_3 = arith.constant 0 : index
    %1 = vector.load %arg2[%c0_1, %c0_2, %c0_3] : memref<1x72x256xbf16, #tpu.memory_space<vmem>>, vector<1x72x256xbf16>
    %2 = vector.shape_cast %1 : vector<1x72x256xbf16> to vector<72x256xbf16>
    %cst = arith.constant dense<0.000000e+00> : vector<4x256xf32>
    %3 = tpu.matmul %0, %2, %cst {dimension_numbers = #tpu.dot_dimension_numbers<[1], [0], [0], [1], [0, 0, 1, 1], [], []>} : vector<4x72xbf16>, vector<72x256xbf16>, vector<4x256xf32> -> vector<4x256xf32>
    %c0_4 = arith.constant 0 : index
    %c0_5 = arith.constant 0 : index
    %4 = vector.load %arg4[%c0_4, %c0_5] : memref<4x1xf32, #tpu.memory_space<vmem>>, vector<4x1xf32>
    %5 = vector.broadcast %4 : vector<4x1xf32> to vector<4x256xf32>
    %6 = arith.mulf %3, %5 : vector<4x256xf32>
    %c0_6 = arith.constant 0 : index
    %c0_7 = arith.constant 0 : index
    %7 = vector.load %arg5[%c0_6, %c0_7] : memref<4x1xf32, #tpu.memory_space<vmem>>, vector<4x1xf32>
    %8 = vector.broadcast %7 : vector<4x1xf32> to vector<4x256xf32>
    %9 = arith.addf %6, %8 : vector<4x256xf32>
    %cst_8 = arith.constant 0.000000e+00 : f32
    %10 = vector.broadcast %cst_8 : f32 to vector<4x256xf32>
    %11 = arith.maximumf %9, %10 : vector<4x256xf32>
    %12 = arith.truncf %11 : vector<4x256xf32> to vector<4x256xbf16>
    %c0_9 = arith.constant 0 : index
    %c0_10 = arith.constant 0 : index
    %c0_11 = arith.constant 0 : index
    %13 = vector.load %arg6[%c0_9, %c0_10, %c0_11] : memref<1x4x256xbf16, #tpu.memory_space<vmem>>, vector<1x4x256xbf16>
    %14 = vector.shape_cast %13 : vector<1x4x256xbf16> to vector<4x256xbf16>
    %15 = vector.shape_cast %12 : vector<4x256xbf16> to vector<1x4x256xbf16>
    tpu.vector_store %arg6[%c0_9, %c0_10, %c0_11], %15 {strides = array<i32>} : memref<1x4x256xbf16, #tpu.memory_space<vmem>>, vector<1x4x256xbf16>,
    return
  }
  func.func @transform_0(%arg0: i32, %arg1: i32) -> (i32, i32, i32) {
    %c0_i32 = arith.constant 0 : i32
    %c0_i32_0 = arith.constant 0 : i32
    return %arg0, %c0_i32, %arg1 : i32, i32, i32
  }
  func.func @transform_1(%arg0: i32, %arg1: i32) -> (i32, i32) {
    %c0_i32 = arith.constant 0 : i32
    %c0_i32_0 = arith.constant 0 : i32
    %c0_i32_1 = arith.constant 0 : i32
    return %c0_i32, %c0_i32_0 : i32, i32
  }
  func.func @transform_2(%arg0: i32, %arg1: i32) -> (i32, i32) {
    %c0_i32 = arith.constant 0 : i32
    %c0_i32_0 = arith.constant 0 : i32
    %c0_i32_1 = arith.constant 0 : i32
    return %c0_i32, %c0_i32_0 : i32, i32
  }
  func.func @transform_3(%arg0: i32, %arg1: i32) -> (i32, i32) {
    %c0_i32 = arith.constant 0 : i32
    %c0_i32_0 = arith.constant 0 : i32
    %c0_i32_1 = arith.constant 0 : i32
    return %c0_i32, %c0_i32_0 : i32, i32
  }
  func.func @transform_4(%arg0: i32, %arg1: i32) -> (i32, i32, i32) {
    %c0_i32 = arith.constant 0 : i32
    %c0_i32_0 = arith.constant 0 : i32
    return %arg0, %c0_i32, %arg1 : i32, i32, i32
  }
}

module attributes {stable_mosaic.version = 11 : i64} {
  func.func @fused_tail_kernel(%arg0: i32, %arg1: memref<1x36x256xbf16, #tpu.memory_space<vmem>>, %arg2: memref<1x4x256xbf16, #tpu.memory_space<vmem>>, %arg3: memref<4x36xbf16, #tpu.memory_space<vmem>>, %arg4: memref<4x1xf32, #tpu.memory_space<vmem>>, %arg5: memref<4x1xf32, #tpu.memory_space<vmem>>, %arg6: memref<2x4xf32, #tpu.memory_space<vmem>>, %arg7: memref<2x1xf32, #tpu.memory_space<vmem>>, %arg8: memref<4x2xf32, #tpu.memory_space<vmem>>, %arg9: memref<4x1xf32, #tpu.memory_space<vmem>>, %arg10: memref<4x4xbf16, #tpu.memory_space<vmem>>, %arg11: memref<4x1xf32, #tpu.memory_space<vmem>>, %arg12: memref<4x1xf32, #tpu.memory_space<vmem>>, %arg13: memref<2x1xf32, #tpu.memory_space<vmem>>, %arg14: memref<1x1xf32, #tpu.memory_space<vmem>>, %arg15: memref<1x1xf32, #tpu.memory_space<vmem>>, %arg16: memref<2x4xbf16, #tpu.memory_space<vmem>>, %arg17: memref<2x1xf32, #tpu.memory_space<vmem>>, %arg18: memref<2x1xf32, #tpu.memory_space<vmem>>, %arg19: memref<4x2xbf16, #tpu.memory_space<vmem>>, %arg20: memref<4x1xf32, #tpu.memory_space<vmem>>, %arg21: memref<4x1xf32, #tpu.memory_space<vmem>>, %arg22: memref<1x4x256xf32, #tpu.memory_space<vmem>>) attributes {dimension_semantics = [#tpu.dimension_semantics<parallel>], iteration_bounds = array<i64: 2>, scalar_prefetch = 0 : i64, scratch_operands = 0 : i64, tpu.core_type = #tpu.core_type<tc>, window_params = [{transform_indices = @transform_0, window_bounds = array<i64: 1, 36, 256>}, {transform_indices = @transform_1, window_bounds = array<i64: 1, 4, 256>}, {pipeline_mode = #tpu.pipeline_mode<synchronous>, transform_indices = @transform_2, window_bounds = array<i64: 4, 36>}, {pipeline_mode = #tpu.pipeline_mode<synchronous>, transform_indices = @transform_3, window_bounds = array<i64: 4, 1>}, {pipeline_mode = #tpu.pipeline_mode<synchronous>, transform_indices = @transform_4, window_bounds = array<i64: 4, 1>}, {pipeline_mode = #tpu.pipeline_mode<synchronous>, transform_indices = @transform_5, window_bounds = array<i64: 2, 4>}, {pipeline_mode = #tpu.pipeline_mode<synchronous>, transform_indices = @transform_6, window_bounds = array<i64: 2, 1>}, {pipeline_mode = #tpu.pipeline_mode<synchronous>, transform_indices = @transform_7, window_bounds = array<i64: 4, 2>}, {pipeline_mode = #tpu.pipeline_mode<synchronous>, transform_indices = @transform_8, window_bounds = array<i64: 4, 1>}, {pipeline_mode = #tpu.pipeline_mode<synchronous>, transform_indices = @transform_9, window_bounds = array<i64: 4, 4>}, {pipeline_mode = #tpu.pipeline_mode<synchronous>, transform_indices = @transform_10, window_bounds = array<i64: 4, 1>}, {pipeline_mode = #tpu.pipeline_mode<synchronous>, transform_indices = @transform_11, window_bounds = array<i64: 4, 1>}, {pipeline_mode = #tpu.pipeline_mode<synchronous>, transform_indices = @transform_12, window_bounds = array<i64: 2, 1>}, {pipeline_mode = #tpu.pipeline_mode<synchronous>, transform_indices = @transform_13, window_bounds = array<i64: 1, 1>}, {pipeline_mode = #tpu.pipeline_mode<synchronous>, transform_indices = @transform_14, window_bounds = array<i64: 1, 1>}, {pipeline_mode = #tpu.pipeline_mode<synchronous>, transform_indices = @transform_15, window_bounds = array<i64: 2, 4>}, {pipeline_mode = #tpu.pipeline_mode<synchronous>, transform_indices = @transform_16, window_bounds = array<i64: 2, 1>}, {pipeline_mode = #tpu.pipeline_mode<synchronous>, transform_indices = @transform_17, window_bounds = array<i64: 2, 1>}, {pipeline_mode = #tpu.pipeline_mode<synchronous>, transform_indices = @transform_18, window_bounds = array<i64: 4, 2>}, {pipeline_mode = #tpu.pipeline_mode<synchronous>, transform_indices = @transform_19, window_bounds = array<i64: 4, 1>}, {pipeline_mode = #tpu.pipeline_mode<synchronous>, transform_indices = @transform_20, window_bounds = array<i64: 4, 1>}, {transform_indices = @transform_21, window_bounds = array<i64: 1, 4, 256>}]} {
    %c0 = arith.constant 0 : index
    %c0_0 = arith.constant 0 : index
    %0 = vector.load %arg3[%c0, %c0_0] : memref<4x36xbf16, #tpu.memory_space<vmem>>, vector<4x36xbf16>
    %c0_1 = arith.constant 0 : index
    %c0_2 = arith.constant 0 : index
    %c0_3 = arith.constant 0 : index
    %1 = vector.load %arg1[%c0_1, %c0_2, %c0_3] : memref<1x36x256xbf16, #tpu.memory_space<vmem>>, vector<1x36x256xbf16>
    %2 = vector.shape_cast %1 : vector<1x36x256xbf16> to vector<36x256xbf16>
    %cst = arith.constant dense<0.000000e+00> : vector<4x256xf32>
    %3 = tpu.matmul %0, %2, %cst {dimension_numbers = #tpu.dot_dimension_numbers<[1], [0], [0], [1], [0, 0, 1, 1], [], []>} : vector<4x36xbf16>, vector<36x256xbf16>, vector<4x256xf32> -> vector<4x256xf32>
    %c0_4 = arith.constant 0 : index
    %c0_5 = arith.constant 0 : index
    %4 = vector.load %arg4[%c0_4, %c0_5] : memref<4x1xf32, #tpu.memory_space<vmem>>, vector<4x1xf32>
    %5 = vector.broadcast %4 : vector<4x1xf32> to vector<4x256xf32>
    %6 = arith.mulf %3, %5 : vector<4x256xf32>
    %c0_6 = arith.constant 0 : index
    %c0_7 = arith.constant 0 : index
    %7 = vector.load %arg5[%c0_6, %c0_7] : memref<4x1xf32, #tpu.memory_space<vmem>>, vector<4x1xf32>
    %8 = vector.broadcast %7 : vector<4x1xf32> to vector<4x256xf32>
    %9 = arith.addf %6, %8 : vector<4x256xf32>
    %cst_8 = arith.constant 0.000000e+00 : f32
    %10 = vector.broadcast %cst_8 : f32 to vector<4x256xf32>
    %11 = arith.maximumf %9, %10 : vector<4x256xf32>
    %c0_9 = arith.constant 0 : index
    %c0_10 = arith.constant 0 : index
    %c0_11 = arith.constant 0 : index
    %12 = vector.load %arg2[%c0_9, %c0_10, %c0_11] : memref<1x4x256xbf16, #tpu.memory_space<vmem>>, vector<1x4x256xbf16>
    %13 = vector.shape_cast %12 : vector<1x4x256xbf16> to vector<4x256xbf16>
    %14 = arith.extf %13 : vector<4x256xbf16> to vector<4x256xf32>
    %15 = arith.addf %14, %11 : vector<4x256xf32>
    %cst_12 = arith.constant dense<0.000000e+00> : vector<4xf32>
    %16 = vector.multi_reduction <add>, %15, %cst_12 [1] : vector<4x256xf32> to vector<4xf32>
    %17 = vector.shape_cast %16 : vector<4xf32> to vector<4x1xf32>
    %cst_13 = arith.constant 2.560000e+02 : f32
    %18 = vector.broadcast %cst_13 : f32 to vector<4x1xf32>
    %19 = arith.divf %17, %18 : vector<4x1xf32>
    %c0_14 = arith.constant 0 : index
    %c0_15 = arith.constant 0 : index
    %20 = vector.load %arg6[%c0_14, %c0_15] : memref<2x4xf32, #tpu.memory_space<vmem>>, vector<2x4xf32>
    %cst_16 = arith.constant dense<0.000000e+00> : vector<2x1xf32>
    %21 = tpu.matmul %20, %19, %cst_16 {dimension_numbers = #tpu.dot_dimension_numbers<[1], [0], [0], [1], [0, 0, 1, 1], [], []>} : vector<2x4xf32>, vector<4x1xf32>, vector<2x1xf32> -> vector<2x1xf32>
    %c0_17 = arith.constant 0 : index
    %c0_18 = arith.constant 0 : index
    %22 = vector.load %arg7[%c0_17, %c0_18] : memref<2x1xf32, #tpu.memory_space<vmem>>, vector<2x1xf32>
    %23 = arith.addf %21, %22 : vector<2x1xf32>
    %cst_19 = arith.constant 0.000000e+00 : f32
    %24 = vector.broadcast %cst_19 : f32 to vector<2x1xf32>
    %25 = arith.maximumf %23, %24 : vector<2x1xf32>
    %c0_20 = arith.constant 0 : index
    %c0_21 = arith.constant 0 : index
    %26 = vector.load %arg8[%c0_20, %c0_21] : memref<4x2xf32, #tpu.memory_space<vmem>>, vector<4x2xf32>
    %cst_22 = arith.constant dense<0.000000e+00> : vector<4x1xf32>
    %27 = tpu.matmul %26, %25, %cst_22 {dimension_numbers = #tpu.dot_dimension_numbers<[1], [0], [0], [1], [0, 0, 1, 1], [], []>} : vector<4x2xf32>, vector<2x1xf32>, vector<4x1xf32> -> vector<4x1xf32>
    %c0_23 = arith.constant 0 : index
    %c0_24 = arith.constant 0 : index
    %28 = vector.load %arg9[%c0_23, %c0_24] : memref<4x1xf32, #tpu.memory_space<vmem>>, vector<4x1xf32>
    %29 = arith.addf %27, %28 : vector<4x1xf32>
    %30 = arith.negf %29 : vector<4x1xf32>
    %31 = math.exp %30 : vector<4x1xf32>
    %cst_25 = arith.constant 1.000000e+00 : f32
    %32 = vector.broadcast %cst_25 : f32 to vector<4x1xf32>
    %33 = arith.addf %32, %31 : vector<4x1xf32>
    %34 = arith.divf %32, %33 : vector<4x1xf32>
    %35 = vector.broadcast %34 : vector<4x1xf32> to vector<4x256xf32>
    %36 = arith.mulf %15, %35 : vector<4x256xf32>
    %37 = arith.truncf %15 : vector<4x256xf32> to vector<4x256xbf16>
    %c0_26 = arith.constant 0 : index
    %c0_27 = arith.constant 0 : index
    %38 = vector.load %arg10[%c0_26, %c0_27] : memref<4x4xbf16, #tpu.memory_space<vmem>>, vector<4x4xbf16>
    %cst_28 = arith.constant dense<0.000000e+00> : vector<4x256xf32>
    %39 = tpu.matmul %38, %37, %cst_28 {dimension_numbers = #tpu.dot_dimension_numbers<[1], [0], [0], [1], [0, 0, 1, 1], [], []>} : vector<4x4xbf16>, vector<4x256xbf16>, vector<4x256xf32> -> vector<4x256xf32>
    %c0_29 = arith.constant 0 : index
    %c0_30 = arith.constant 0 : index
    %40 = vector.load %arg11[%c0_29, %c0_30] : memref<4x1xf32, #tpu.memory_space<vmem>>, vector<4x1xf32>
    %41 = vector.broadcast %40 : vector<4x1xf32> to vector<4x256xf32>
    %42 = arith.mulf %39, %41 : vector<4x256xf32>
    %c0_31 = arith.constant 0 : index
    %c0_32 = arith.constant 0 : index
    %43 = vector.load %arg12[%c0_31, %c0_32] : memref<4x1xf32, #tpu.memory_space<vmem>>, vector<4x1xf32>
    %44 = vector.broadcast %43 : vector<4x1xf32> to vector<4x256xf32>
    %45 = arith.addf %42, %44 : vector<4x256xf32>
    %46 = vector.extract_strided_slice %45 {offsets = [0, 0], sizes = [2, 256], strides = [1, 1]} : vector<4x256xf32> to vector<2x256xf32>
    %47 = vector.extract_strided_slice %45 {offsets = [2, 0], sizes = [2, 256], strides = [1, 1]} : vector<4x256xf32> to vector<2x256xf32>
    %c0_33 = arith.constant 0 : index
    %c0_34 = arith.constant 0 : index
    %48 = vector.load %arg13[%c0_33, %c0_34] : memref<2x1xf32, #tpu.memory_space<vmem>>, vector<2x1xf32>
    %49 = vector.broadcast %48 : vector<2x1xf32> to vector<2x256xf32>
    %50 = arith.mulf %46, %49 : vector<2x256xf32>
    %cst_35 = arith.constant dense<0.000000e+00> : vector<256xf32>
    %51 = vector.multi_reduction <add>, %50, %cst_35 [0] : vector<2x256xf32> to vector<256xf32>
    %52 = vector.shape_cast %51 : vector<256xf32> to vector<1x256xf32>
    %c0_36 = arith.constant 0 : index
    %c0_37 = arith.constant 0 : index
    %53 = vector.load %arg14[%c0_36, %c0_37] : memref<1x1xf32, #tpu.memory_space<vmem>>, vector<1x1xf32>
    %54 = vector.broadcast %53 : vector<1x1xf32> to vector<1x256xf32>
    %55 = arith.mulf %52, %54 : vector<1x256xf32>
    %c0_38 = arith.constant 0 : index
    %c0_39 = arith.constant 0 : index
    %56 = vector.load %arg15[%c0_38, %c0_39] : memref<1x1xf32, #tpu.memory_space<vmem>>, vector<1x1xf32>
    %57 = vector.broadcast %56 : vector<1x1xf32> to vector<1x256xf32>
    %58 = arith.addf %55, %57 : vector<1x256xf32>
    %c0_40 = arith.constant 0 : index
    %c0_41 = arith.constant 0 : index
    %59 = vector.load %arg16[%c0_40, %c0_41] : memref<2x4xbf16, #tpu.memory_space<vmem>>, vector<2x4xbf16>
    %60 = arith.truncf %36 : vector<4x256xf32> to vector<4x256xbf16>
    %cst_42 = arith.constant dense<0.000000e+00> : vector<2x256xf32>
    %61 = tpu.matmul %59, %60, %cst_42 {dimension_numbers = #tpu.dot_dimension_numbers<[1], [0], [0], [1], [0, 0, 1, 1], [], []>} : vector<2x4xbf16>, vector<4x256xbf16>, vector<2x256xf32> -> vector<2x256xf32>
    %c0_43 = arith.constant 0 : index
    %c0_44 = arith.constant 0 : index
    %62 = vector.load %arg17[%c0_43, %c0_44] : memref<2x1xf32, #tpu.memory_space<vmem>>, vector<2x1xf32>
    %63 = vector.broadcast %62 : vector<2x1xf32> to vector<2x256xf32>
    %64 = arith.mulf %61, %63 : vector<2x256xf32>
    %c0_45 = arith.constant 0 : index
    %c0_46 = arith.constant 0 : index
    %65 = vector.load %arg18[%c0_45, %c0_46] : memref<2x1xf32, #tpu.memory_space<vmem>>, vector<2x1xf32>
    %66 = vector.broadcast %65 : vector<2x1xf32> to vector<2x256xf32>
    %67 = arith.addf %64, %66 : vector<2x256xf32>
    %68 = vector.broadcast %58 : vector<1x256xf32> to vector<2x256xf32>
    %69 = arith.mulf %68, %47 : vector<2x256xf32>
    %70 = arith.addf %69, %67 : vector<2x256xf32>
    %c0_47 = arith.constant 0 : index
    %c0_48 = arith.constant 0 : index
    %71 = vector.load %arg19[%c0_47, %c0_48] : memref<4x2xbf16, #tpu.memory_space<vmem>>, vector<4x2xbf16>
    %72 = arith.truncf %70 : vector<2x256xf32> to vector<2x256xbf16>
    %cst_49 = arith.constant dense<0.000000e+00> : vector<4x256xf32>
    %73 = tpu.matmul %71, %72, %cst_49 {dimension_numbers = #tpu.dot_dimension_numbers<[1], [0], [0], [1], [0, 0, 1, 1], [], []>} : vector<4x2xbf16>, vector<2x256xbf16>, vector<4x256xf32> -> vector<4x256xf32>
    %c0_50 = arith.constant 0 : index
    %c0_51 = arith.constant 0 : index
    %74 = vector.load %arg20[%c0_50, %c0_51] : memref<4x1xf32, #tpu.memory_space<vmem>>, vector<4x1xf32>
    %75 = vector.broadcast %74 : vector<4x1xf32> to vector<4x256xf32>
    %76 = arith.mulf %73, %75 : vector<4x256xf32>
    %c0_52 = arith.constant 0 : index
    %c0_53 = arith.constant 0 : index
    %77 = vector.load %arg21[%c0_52, %c0_53] : memref<4x1xf32, #tpu.memory_space<vmem>>, vector<4x1xf32>
    %78 = vector.broadcast %77 : vector<4x1xf32> to vector<4x256xf32>
    %79 = arith.addf %76, %78 : vector<4x256xf32>
    %cst_54 = arith.constant 0.000000e+00 : f32
    %80 = vector.broadcast %cst_54 : f32 to vector<4x256xf32>
    %81 = arith.maximumf %79, %80 : vector<4x256xf32>
    %c0_55 = arith.constant 0 : index
    %c0_56 = arith.constant 0 : index
    %c0_57 = arith.constant 0 : index
    %82 = vector.load %arg22[%c0_55, %c0_56, %c0_57] : memref<1x4x256xf32, #tpu.memory_space<vmem>>, vector<1x4x256xf32>
    %83 = vector.shape_cast %82 : vector<1x4x256xf32> to vector<4x256xf32>
    %84 = vector.shape_cast %81 : vector<4x256xf32> to vector<1x4x256xf32>
    tpu.vector_store %arg22[%c0_55, %c0_56, %c0_57], %84 {strides = array<i32>} : memref<1x4x256xf32, #tpu.memory_space<vmem>>, vector<1x4x256xf32>,
    return
  }
  func.func @transform_0(%arg0: i32) -> (i32, i32, i32) {
    %c0_i32 = arith.constant 0 : i32
    %c0_i32_0 = arith.constant 0 : i32
    %c0_i32_1 = arith.constant 0 : i32
    return %arg0, %c0_i32, %c0_i32_0 : i32, i32, i32
  }
  func.func @transform_1(%arg0: i32) -> (i32, i32, i32) {
    %c0_i32 = arith.constant 0 : i32
    %c0_i32_0 = arith.constant 0 : i32
    %c0_i32_1 = arith.constant 0 : i32
    return %arg0, %c0_i32, %c0_i32_0 : i32, i32, i32
  }
  func.func @transform_2(%arg0: i32) -> (i32, i32) {
    %c0_i32 = arith.constant 0 : i32
    %c0_i32_0 = arith.constant 0 : i32
    %c0_i32_1 = arith.constant 0 : i32
    return %c0_i32, %c0_i32_0 : i32, i32
  }
  func.func @transform_3(%arg0: i32) -> (i32, i32) {
    %c0_i32 = arith.constant 0 : i32
    %c0_i32_0 = arith.constant 0 : i32
    %c0_i32_1 = arith.constant 0 : i32
    return %c0_i32, %c0_i32_0 : i32, i32
  }
  func.func @transform_4(%arg0: i32) -> (i32, i32) {
    %c0_i32 = arith.constant 0 : i32
    %c0_i32_0 = arith.constant 0 : i32
    %c0_i32_1 = arith.constant 0 : i32
    return %c0_i32, %c0_i32_0 : i32, i32
  }
  func.func @transform_5(%arg0: i32) -> (i32, i32) {
    %c0_i32 = arith.constant 0 : i32
    %c0_i32_0 = arith.constant 0 : i32
    %c0_i32_1 = arith.constant 0 : i32
    return %c0_i32, %c0_i32_0 : i32, i32
  }
  func.func @transform_6(%arg0: i32) -> (i32, i32) {
    %c0_i32 = arith.constant 0 : i32
    %c0_i32_0 = arith.constant 0 : i32
    %c0_i32_1 = arith.constant 0 : i32
    return %c0_i32, %c0_i32_0 : i32, i32
  }
  func.func @transform_7(%arg0: i32) -> (i32, i32) {
    %c0_i32 = arith.constant 0 : i32
    %c0_i32_0 = arith.constant 0 : i32
    %c0_i32_1 = arith.constant 0 : i32
    return %c0_i32, %c0_i32_0 : i32, i32
  }
  func.func @transform_8(%arg0: i32) -> (i32, i32) {
    %c0_i32 = arith.constant 0 : i32
    %c0_i32_0 = arith.constant 0 : i32
    %c0_i32_1 = arith.constant 0 : i32
    return %c0_i32, %c0_i32_0 : i32, i32
  }
  func.func @transform_9(%arg0: i32) -> (i32, i32) {
    %c0_i32 = arith.constant 0 : i32
    %c0_i32_0 = arith.constant 0 : i32
    %c0_i32_1 = arith.constant 0 : i32
    return %c0_i32, %c0_i32_0 : i32, i32
  }
  func.func @transform_10(%arg0: i32) -> (i32, i32) {
    %c0_i32 = arith.constant 0 : i32
    %c0_i32_0 = arith.constant 0 : i32
    %c0_i32_1 = arith.constant 0 : i32
    return %c0_i32, %c0_i32_0 : i32, i32
  }
  func.func @transform_11(%arg0: i32) -> (i32, i32) {
    %c0_i32 = arith.constant 0 : i32
    %c0_i32_0 = arith.constant 0 : i32
    %c0_i32_1 = arith.constant 0 : i32
    return %c0_i32, %c0_i32_0 : i32, i32
  }
  func.func @transform_12(%arg0: i32) -> (i32, i32) {
    %c0_i32 = arith.constant 0 : i32
    %c0_i32_0 = arith.constant 0 : i32
    %c0_i32_1 = arith.constant 0 : i32
    return %c0_i32, %c0_i32_0 : i32, i32
  }
  func.func @transform_13(%arg0: i32) -> (i32, i32) {
    %c0_i32 = arith.constant 0 : i32
    %c0_i32_0 = arith.constant 0 : i32
    %c0_i32_1 = arith.constant 0 : i32
    return %c0_i32, %c0_i32_0 : i32, i32
  }
  func.func @transform_14(%arg0: i32) -> (i32, i32) {
    %c0_i32 = arith.constant 0 : i32
    %c0_i32_0 = arith.constant 0 : i32
    %c0_i32_1 = arith.constant 0 : i32
    return %c0_i32, %c0_i32_0 : i32, i32
  }
  func.func @transform_15(%arg0: i32) -> (i32, i32) {
    %c0_i32 = arith.constant 0 : i32
    %c0_i32_0 = arith.constant 0 : i32
    %c0_i32_1 = arith.constant 0 : i32
    return %c0_i32, %c0_i32_0 : i32, i32
  }
  func.func @transform_16(%arg0: i32) -> (i32, i32) {
    %c0_i32 = arith.constant 0 : i32
    %c0_i32_0 = arith.constant 0 : i32
    %c0_i32_1 = arith.constant 0 : i32
    return %c0_i32, %c0_i32_0 : i32, i32
  }
  func.func @transform_17(%arg0: i32) -> (i32, i32) {
    %c0_i32 = arith.constant 0 : i32
    %c0_i32_0 = arith.constant 0 : i32
    %c0_i32_1 = arith.constant 0 : i32
    return %c0_i32, %c0_i32_0 : i32, i32
  }
  func.func @transform_18(%arg0: i32) -> (i32, i32) {
    %c0_i32 = arith.constant 0 : i32
    %c0_i32_0 = arith.constant 0 : i32
    %c0_i32_1 = arith.constant 0 : i32
    return %c0_i32, %c0_i32_0 : i32, i32
  }
  func.func @transform_19(%arg0: i32) -> (i32, i32) {
    %c0_i32 = arith.constant 0 : i32
    %c0_i32_0 = arith.constant 0 : i32
    %c0_i32_1 = arith.constant 0 : i32
    return %c0_i32, %c0_i32_0 : i32, i32
  }
  func.func @transform_20(%arg0: i32) -> (i32, i32) {
    %c0_i32 = arith.constant 0 : i32
    %c0_i32_0 = arith.constant 0 : i32
    %c0_i32_1 = arith.constant 0 : i32
    return %c0_i32, %c0_i32_0 : i32, i32
  }
  func.func @transform_21(%arg0: i32) -> (i32, i32, i32) {
    %c0_i32 = arith.constant 0 : i32
    %c0_i32_0 = arith.constant 0 : i32
    %c0_i32_1 = arith.constant 0 : i32
    return %arg0, %c0_i32, %c0_i32_0 : i32, i32, i32
  }
}

</mosaic_0001>

<llo_original>
// kernel: attnblock_forward.3
$region0: #{attnblock_forward.3}
  #allocation0 [shape = 'u32[]', space=smem, size = 0x4, offset = 0x4, fixed_abs, tag = 'smem constant byte address 0x4 - core index']
  #allocation1 [shape = 'u32[72,128]{1,0:T(1,128)}', space=vmem, size = 0x9000, scoped, tag = 'internal scratch']
  %s0 = inlined_call_operand.vmem [shape: bf16[2,8,64], index: 0, kind: input, shape index: {}]
  %s1 = inlined_call_operand.vmem [shape: bf16[16,8], index: 1, kind: input, shape index: {}]
  %s2 = inlined_call_operand.vmem [shape: f32[16,1], index: 2, kind: input, shape index: {}]
  %s3 = inlined_call_operand.vmem [shape: bf16[2,16,64], index: 3, kind: output, shape index: {}]
  %s4 = sld [smem:[#allocation0]]
  $region45: #{attnblock_forward.3} parent=0
    _
  %s6 = ssub.s32 1, %s4
  %s7 = scalar_select 0, %s6, %s4
  loop: start=0, step=1, limit=4
  $region2: #{attnblock_forward.3} parent=0 // loop_pre_header
    _
  $region3: #{attnblock_forward.3} parent=0 // loop_header
    %s9 = sphi 0, %s13
    %p10 = scmp.ge.s32.totalorder %s9, 4
    %s19 = sphi 0, %s21
    %s22 = sphi 0, %s19
    %s23 = sphi 0, %s22
    %s39 = sphi 0, %s23
    %s43 = sphi 0, %s43
    %s45 = sphi 0, %s43
    %s46 = sphi 0, %s45
    %s60 = sphi 0, %s46
    %s64 = sphi 0, %s64
    %s66 = sphi 0, %s64
    %s67 = sphi 0, %s66
    %s81 = sphi 0, %s67
    %s87 = sphi 0, %s89
    %s90 = sphi 0, %s87
    %s91 = sphi 0, %s90
    %s107 = sphi 0, %s91
  $region4: #{attnblock_forward.3} parent=0 // loop_header_branch
    %12 = sbr.rel (%p10) target = $region8
  $region5: #{attnblock_forward.3} parent=0 // loop_body
    %s14 = ssub.s32 %s9, 1
    %s15 = ssub.s32 %s9, 2
    %s16 = sadd.s32 %s9, 1
    %s17 = ssub.s32 %s9, %s16
    %p18 = scmp.eq.s32.totalorder %s17, 0
    %s20 = sadd.s32 %s19, 1
    %s21 = scalar_select %p18, %s19, %s20
    %p24 = pneg %p18
    %p25 = scmp.eq.s32.totalorder %s9, 1
    %p26 = por %p24, %p25
    %p27 = scmp.ne.s32.totalorder %s19, %s22
    %p28 = scmp.eq.s32.totalorder %s9, 0
    %p29 = por %p27, %p28
    %p30 = scmp.ne.s32.totalorder %s19, %s22
    %p31 = scmp.eq.s32.totalorder %s14, 1
    %p32 = por %p30, %p31
    %p33 = scmp.ne.s32.totalorder %s22, %s23
    %p34 = scmp.eq.s32.totalorder %s14, 0
    %p35 = por %p33, %p34
    %p36 = scmp.ne.s32.totalorder %s22, %s23
    %p37 = scmp.eq.s32.totalorder %s15, 1
    %p38 = por %p36, %p37
    %p40 = scmp.ne.s32.totalorder %s23, %s39
    %p41 = scmp.eq.s32.totalorder %s15, 0
    %p42 = por %p40, %p41
    %s44 = sadd.s32 %s43, 1
    %p47 = scmp.eq.s32.totalorder %s9, 1
    %p48 = scmp.ne.s32.totalorder %s43, %s45
    %p49 = scmp.eq.s32.totalorder %s9, 0
    %p50 = por %p48, %p49
    %p51 = scmp.ne.s32.totalorder %s43, %s45
    %p52 = scmp.eq.s32.totalorder %s14, 1
    %p53 = por %p51, %p52
    %p54 = scmp.ne.s32.totalorder %s45, %s46
    %p55 = scmp.eq.s32.totalorder %s14, 0
    %p56 = por %p54, %p55
    %p57 = scmp.ne.s32.totalorder %s45, %s46
    %p58 = scmp.eq.s32.totalorder %s15, 1
    %p59 = por %p57, %p58
    %p61 = scmp.ne.s32.totalorder %s46, %s60
    %p62 = scmp.eq.s32.totalorder %s15, 0
    %p63 = por %p61, %p62
    %s65 = sadd.s32 %s64, 1
    %p68 = scmp.eq.s32.totalorder %s9, 1
    %p69 = scmp.ne.s32.totalorder %s64, %s66
    %p70 = scmp.eq.s32.totalorder %s9, 0
    %p71 = por %p69, %p70
    %p72 = scmp.ne.s32.totalorder %s64, %s66
    %p73 = scmp.eq.s32.totalorder %s14, 1
    %p74 = por %p72, %p73
    %p75 = scmp.ne.s32.totalorder %s66, %s67
    %p76 = scmp.eq.s32.totalorder %s14, 0
    %p77 = por %p75, %p76
    %p78 = scmp.ne.s32.totalorder %s66, %s67
    %p79 = scmp.eq.s32.totalorder %s15, 1
    %p80 = por %p78, %p79
    %p82 = scmp.ne.s32.totalorder %s67, %s81
    %p83 = scmp.eq.s32.totalorder %s15, 0
    %p84 = por %p82, %p83
    %s85 = ssub.s32 %s9, %s16
    %p86 = scmp.eq.s32.totalorder %s85, 0
    %s88 = sadd.s32 %s87, 1
    %s89 = scalar_select %p86, %s87, %s88
    %p92 = pneg %p86
    %p93 = scmp.eq.s32.totalorder %s9, 1
    %p94 = por %p92, %p93
    %p95 = scmp.ne.s32.totalorder %s87, %s90
    %p96 = scmp.eq.s32.totalorder %s9, 0
    %p97 = por %p95, %p96
    %p98 = scmp.ne.s32.totalorder %s87, %s90
    %p99 = scmp.eq.s32.totalorder %s14, 1
    %p100 = por %p98, %p99
    %p101 = scmp.ne.s32.totalorder %s90, %s91
    %p102 = scmp.eq.s32.totalorder %s14, 0
    %p103 = por %p101, %p102
    %p104 = scmp.ne.s32.totalorder %s90, %s91
    %p105 = scmp.eq.s32.totalorder %s15, 1
    %p106 = por %p104, %p105
    %p108 = scmp.ne.s32.totalorder %s91, %s107
    %p109 = scmp.eq.s32.totalorder %s15, 0
    %p110 = por %p108, %p109
    %p111 = scmp.le.s32.totalorder 1, %s9
    %p112 = scmp.lt.s32.totalorder %s9, 3
    %p113 = pnand %p111, %p112
    %p114 = pneg %p113
    // Predicated region
    $region9: #{attnblock_forward.3} parent=5 // pred_check
      _
    $region10: #{attnblock_forward.3} parent=5 // pred_check_branch
      %116 = sbr.rel (%p113) target = $region12
    $region11: #{attnblock_forward.3} parent=5 // pred_region
      %s117 = ssub.s32 %s9, 1
      // Predicated region
      $region13: #{attnblock_forward.3} parent=11 // pred_check
        %p118 = pneg %p56
      $region14: #{attnblock_forward.3} parent=11 // pred_check_branch
        %120 = sbr.rel (%p118) target = $region16
      $region15: #{attnblock_forward.3} parent=11 // pred_region
        _
      $region16: #{attnblock_forward.3} parent=11 // pred_fallthru
        _
      // Predicated region
      $region17: #{attnblock_forward.3} parent=11 // pred_check
        %p121 = pneg %p77
      $region18: #{attnblock_forward.3} parent=11 // pred_check_branch
        %123 = sbr.rel (%p121) target = $region20
      $region19: #{attnblock_forward.3} parent=11 // pred_region
        _
      $region20: #{attnblock_forward.3} parent=11 // pred_fallthru
        _
    $region12: #{attnblock_forward.3} parent=5 // pred_fallthru
      _
    %p124 = scmp.lt.s32.totalorder %s9, 2
    // Predicated region
    $region21: #{attnblock_forward.3} parent=5 // pred_check
      %p125 = pneg %p124
    $region22: #{attnblock_forward.3} parent=5 // pred_check_branch
      %127 = sbr.rel (%p125) target = $region24
    $region23: #{attnblock_forward.3} parent=5 // pred_region
      // Predicated region
      $region25: #{attnblock_forward.3} parent=23 // pred_check
        %p128 = pneg %p29
      $region26: #{attnblock_forward.3} parent=23 // pred_check_branch
        %130 = sbr.rel (%p128) target = $region28
      $region27: #{attnblock_forward.3} parent=23 // pred_region
        %p131 = scmp.lt.s32.totalorder %s9, 1
        %s132 = scalar_select %p131, %s9, 1
        %s133 = smul.addr %s132, 4
        %s134 = scalar_lea.vmem %s0, %s133
      $region28: #{attnblock_forward.3} parent=23 // pred_fallthru
        _
    $region24: #{attnblock_forward.3} parent=5 // pred_fallthru
      _
    %p135 = scmp.le.s32.totalorder 1, %s9
    %p136 = scmp.lt.s32.totalorder %s9, 3
    %p137 = pnand %p135, %p136
    %p138 = pneg %p137
    // Predicated region
    $region29: #{attnblock_forward.3} parent=5 // pred_check
      _
    $region30: #{attnblock_forward.3} parent=5 // pred_check_branch
      %140 = sbr.rel (%p137) target = $region32
    $region31: #{attnblock_forward.3} parent=5 // pred_region
      %s141 = ssub.s32 %s9, 1
      %p142 = scmp.lt.s32.totalorder %s14, 1
      %s143 = scalar_select %p142, %s14, 1
      %s144 = smul.addr %s143, 4
      %s145 = scalar_lea.vmem %s0, %s144
      %p146 = pneg %p35
      %p147 = pneg %p32
      %p148 = pneg %p56
      %p149 = pneg %p53
      %p150 = pneg %p77
      %p151 = pneg %p74
      %p152 = pneg %p103
      %p153 = pneg %p100
      %p154 = scmp.lt.s32.totalorder %s14, 1
      %s155 = scalar_select %p154, %s14, 1
      %s156 = smul.addr %s155, 2
      %s157 = smul.addr %s156, 4
      %s158 = scalar_lea.vmem %s3, %s157
      %p159 = scmp.lt.s32.totalorder %s14, 1
      %s160 = scalar_select %p159, %s14, 1
      %s161 = smul.addr %s160, 4
      %s162 = scalar_lea.vmem %s0, %s161
      %p163 = scmp.lt.s32.totalorder %s14, 1
      %s164 = scalar_select %p163, %s14, 1
      %s165 = smul.addr %s164, 2
      %s166 = smul.addr %s165, 4
      %s167 = scalar_lea.vmem %s3, %s166
      %v169 = vld [vmem:[%s1] sm:$0xf]
      %v170 = vld [vmem:[%s1 + $0x4] sm:$0xf]
      %v171 = vld [vmem:[%s162] sm:$0xf]
      %v172 = vld [vmem:[%s2] sm:$0xff]
      %v173 = vld [vmem:[%s2 + $0x8] sm:$0xff]
      %175 = vset.pattern.permute.xlu0 0
      %176 = vperm.xlu0 %175, %v172
      %v177 = vpop.permute.xlu0 %176
      %180 = vset.pattern.permute.xlu0 0
      %181 = vperm.xlu0 %180, %v173
      %v182 = vpop.permute.xlu0 %181
      %v186 = vunpack.c.l.b16 %v169
      %v187 = vunpack.c.l.b16 %v170
      %v188 = vpack.c.b16 %v187, %v186
      %vm189 = vcmask 64512
      %v191 = vsel %vm189, %v188, 0
      %vm193 = vcmask 1043456
      %v195 = vsel %vm193, %v171, 0
      %197 = vmatpush.bf16.msra.mxu0 0
      %198 = vmatpush.bf16.msra.mxu0 0
      %199 = vmatpush.bf16.msra.mxu0 0
      %200 = vmatpush.bf16.msra.mxu0 0
      %201 = vmatpush.bf16.msra.mxu0 0
      %202 = vmatpush.bf16.msra.mxu0 0
      %203 = vmatpush.bf16.msra.mxu0 0
      %204 = vmatpush.bf16.msra.mxu0 %v195
      %205 = vmatmul.bf16.gmra.mxu0 %v191
      %v206 = vpop.f32.mrf.mxu0
      %v207 = vadd.f32 %v177, %v206
      %v208 = vpop.f32.mrf.mxu0
      %v209 = vadd.f32 %v182, %v208
      %210 = vdwg.mxu0
      %v211 = vpack.c.bf16 %v207, %v207
      %v212 = vpack.c.bf16 %v209, %v209
      %vm213 = vcmask 519168
      %214 = vst.msk [vmem:[%s167] sm:$0xf] %vm213, %v211
      %215 = vst.msk [vmem:[%s167 + $0x4] sm:$0xf] %vm213, %v212
      %p216 = scmp.lt.s32.totalorder %s14, 1
      %s217 = scalar_select %p216, %s14, 1
      %s218 = smul.addr %s217, 2
      %s219 = smul.addr %s218, 4
      %s220 = scalar_lea.vmem %s3, %s219
      // Predicated region
      $region33: #{attnblock_forward.3} parent=31 // pred_check
        %p221 = pneg %p100
      $region34: #{attnblock_forward.3} parent=31 // pred_check_branch
        %223 = sbr.rel (%p221) target = $region36
      $region35: #{attnblock_forward.3} parent=31 // pred_region
        _
      $region36: #{attnblock_forward.3} parent=31 // pred_fallthru
        _
    $region32: #{attnblock_forward.3} parent=5 // pred_fallthru
      _
    %p224 = scmp.le.s32.totalorder 2, %s9
    // Predicated region
    $region37: #{attnblock_forward.3} parent=5 // pred_check
      %p225 = pneg %p224
    $region38: #{attnblock_forward.3} parent=5 // pred_check_branch
      %227 = sbr.rel (%p225) target = $region40
    $region39: #{attnblock_forward.3} parent=5 // pred_region
      %s228 = ssub.s32 %s9, 2
      // Predicated region
      $region41: #{attnblock_forward.3} parent=39 // pred_check
        %p229 = pneg %p106
      $region42: #{attnblock_forward.3} parent=39 // pred_check_branch
        %231 = sbr.rel (%p229) target = $region44
      $region43: #{attnblock_forward.3} parent=39 // pred_region
        %p232 = scmp.lt.s32.totalorder %s15, 1
        %s233 = scalar_select %p232, %s15, 1
        %s234 = smul.addr %s233, 2
        %s235 = smul.addr %s234, 4
        %s236 = scalar_lea.vmem %s3, %s235
      $region44: #{attnblock_forward.3} parent=39 // pred_fallthru
        _
    $region40: #{attnblock_forward.3} parent=5 // pred_fallthru
      _
  $region6: #{attnblock_forward.3} parent=0 // loop_footer
    %s13 = sadd.s32 1, %s9
  $region7: #{attnblock_forward.3} parent=0 // loop_footer_branch
    %8 = sbr.rel target = $region3
  $region8: #{attnblock_forward.3} parent=0 // loop_exit
    _

// kernel: attnblock_forward.4
$region0: #{attnblock_forward.4}
  #allocation0 [shape = 'u32[]', space=smem, size = 0x4, offset = 0x4, fixed_abs, tag = 'smem constant byte address 0x4 - core index']
  #allocation1 [shape = 'u32[72,128]{1,0:T(1,128)}', space=vmem, size = 0x9000, scoped, tag = 'internal scratch']
  %s0 = inlined_call_operand.vmem [shape: bf16[2,72,256], index: 0, kind: input, shape index: {}]
  %s1 = inlined_call_operand.vmem [shape: bf16[4,72], index: 1, kind: input, shape index: {}]
  %s2 = inlined_call_operand.vmem [shape: f32[4,1], index: 2, kind: input, shape index: {}]
  %s3 = inlined_call_operand.vmem [shape: f32[4,1], index: 3, kind: input, shape index: {}]
  %s4 = inlined_call_operand.vmem [shape: bf16[2,4,256], index: 4, kind: output, shape index: {}]
  %s5 = sld [smem:[#allocation0]]
  $region49: #{attnblock_forward.4} parent=0
    _
  %s7 = ssub.s32 1, %s5
  %s8 = scalar_select 0, %s7, %s5
  loop: start=0, step=1, limit=4
  $region2: #{attnblock_forward.4} parent=0 // loop_pre_header
    _
  $region3: #{attnblock_forward.4} parent=0 // loop_header
    %s10 = sphi 0, %s14
    %p11 = scmp.ge.s32.totalorder %s10, 4
    %s17 = sphi 0, %s29
    %s18 = sphi 0, %s25
    %s19 = sphi 0, %s17
    %s20 = sphi 0, %s18
    %s21 = sphi 0, %s19
    %s22 = sphi 0, %s20
    %s34 = sphi 0, %s36
    %s37 = sphi 0, %s34
    %s38 = sphi 0, %s37
    %s54 = sphi 0, %s38
    %s58 = sphi 0, %s58
    %s60 = sphi 0, %s58
    %s61 = sphi 0, %s60
    %s75 = sphi 0, %s61
    %s79 = sphi 0, %s79
    %s81 = sphi 0, %s79
    %s82 = sphi 0, %s81
    %s96 = sphi 0, %s82
    %s100 = sphi 0, %s100
    %s102 = sphi 0, %s100
    %s103 = sphi 0, %s102
    %s117 = sphi 0, %s103
    %s125 = sphi 0, %s127
    %s128 = sphi 0, %s125
    %s129 = sphi 0, %s128
    %s145 = sphi 0, %s129
  $region4: #{attnblock_forward.4} parent=0 // loop_header_branch
    %13 = sbr.rel (%p11) target = $region8
  $region5: #{attnblock_forward.4} parent=0 // loop_body
    %s15 = ssub.s32 %s10, 1
    %s16 = ssub.s32 %s10, 2
    %s23 = sadd.s32 1, %s18
    %p24 = scmp.ge.s32.totalorder %s23, 1
    %s25 = scalar_select %p24, 0, %s23
    %s26 = sadd.s32 1, %s17
    %s27 = scalar_select %p24, %s26, %s17
    %p28 = scmp.ge.s32.totalorder %s27, 2
    %s29 = scalar_select %p28, 0, %s27
    %s30 = ssub.s32 %s17, %s29
    %s31 = ssub.s32 %s18, %s25
    %s32 = sor.u32 %s30, %s31
    %p33 = scmp.eq.s32.totalorder %s32, 0
    %s35 = sadd.s32 %s34, 1
    %s36 = scalar_select %p33, %s34, %s35
    %p39 = pneg %p33
    %p40 = scmp.eq.s32.totalorder %s10, 1
    %p41 = por %p39, %p40
    %p42 = scmp.ne.s32.totalorder %s34, %s37
    %p43 = scmp.eq.s32.totalorder %s10, 0
    %p44 = por %p42, %p43
    %p45 = scmp.ne.s32.totalorder %s34, %s37
    %p46 = scmp.eq.s32.totalorder %s15, 1
    %p47 = por %p45, %p46
    %p48 = scmp.ne.s32.totalorder %s37, %s38
    %p49 = scmp.eq.s32.totalorder %s15, 0
    %p50 = por %p48, %p49
    %p51 = scmp.ne.s32.totalorder %s37, %s38
    %p52 = scmp.eq.s32.totalorder %s16, 1
    %p53 = por %p51, %p52
    %p55 = scmp.ne.s32.totalorder %s38, %s54
    %p56 = scmp.eq.s32.totalorder %s16, 0
    %p57 = por %p55, %p56
    %s59 = sadd.s32 %s58, 1
    %p62 = scmp.eq.s32.totalorder %s10, 1
    %p63 = scmp.ne.s32.totalorder %s58, %s60
    %p64 = scmp.eq.s32.totalorder %s10, 0
    %p65 = por %p63, %p64
    %p66 = scmp.ne.s32.totalorder %s58, %s60
    %p67 = scmp.eq.s32.totalorder %s15, 1
    %p68 = por %p66, %p67
    %p69 = scmp.ne.s32.totalorder %s60, %s61
    %p70 = scmp.eq.s32.totalorder %s15, 0
    %p71 = por %p69, %p70
    %p72 = scmp.ne.s32.totalorder %s60, %s61
    %p73 = scmp.eq.s32.totalorder %s16, 1
    %p74 = por %p72, %p73
    %p76 = scmp.ne.s32.totalorder %s61, %s75
    %p77 = scmp.eq.s32.totalorder %s16, 0
    %p78 = por %p76, %p77
    %s80 = sadd.s32 %s79, 1
    %p83 = scmp.eq.s32.totalorder %s10, 1
    %p84 = scmp.ne.s32.totalorder %s79, %s81
    %p85 = scmp.eq.s32.totalorder %s10, 0
    %p86 = por %p84, %p85
    %p87 = scmp.ne.s32.totalorder %s79, %s81
    %p88 = scmp.eq.s32.totalorder %s15, 1
    %p89 = por %p87, %p88
    %p90 = scmp.ne.s32.totalorder %s81, %s82
    %p91 = scmp.eq.s32.totalorder %s15, 0
    %p92 = por %p90, %p91
    %p93 = scmp.ne.s32.totalorder %s81, %s82
    %p94 = scmp.eq.s32.totalorder %s16, 1
    %p95 = por %p93, %p94
    %p97 = scmp.ne.s32.totalorder %s82, %s96
    %p98 = scmp.eq.s32.totalorder %s16, 0
    %p99 = por %p97, %p98
    %s101 = sadd.s32 %s100, 1
    %p104 = scmp.eq.s32.totalorder %s10, 1
    %p105 = scmp.ne.s32.totalorder %s100, %s102
    %p106 = scmp.eq.s32.totalorder %s10, 0
    %p107 = por %p105, %p106
    %p108 = scmp.ne.s32.totalorder %s100, %s102
    %p109 = scmp.eq.s32.totalorder %s15, 1
    %p110 = por %p108, %p109
    %p111 = scmp.ne.s32.totalorder %s102, %s103
    %p112 = scmp.eq.s32.totalorder %s15, 0
    %p113 = por %p111, %p112
    %p114 = scmp.ne.s32.totalorder %s102, %s103
    %p115 = scmp.eq.s32.totalorder %s16, 1
    %p116 = por %p114, %p115
    %p118 = scmp.ne.s32.totalorder %s103, %s117
    %p119 = scmp.eq.s32.totalorder %s16, 0
    %p120 = por %p118, %p119
    %s121 = ssub.s32 %s17, %s29
    %s122 = ssub.s32 %s18, %s25
    %s123 = sor.u32 %s121, %s122
    %p124 = scmp.eq.s32.totalorder %s123, 0
    %s126 = sadd.s32 %s125, 1
    %s127 = scalar_select %p124, %s125, %s126
    %p130 = pneg %p124
    %p131 = scmp.eq.s32.totalorder %s10, 1
    %p132 = por %p130, %p131
    %p133 = scmp.ne.s32.totalorder %s125, %s128
    %p134 = scmp.eq.s32.totalorder %s10, 0
    %p135 = por %p133, %p134
    %p136 = scmp.ne.s32.totalorder %s125, %s128
    %p137 = scmp.eq.s32.totalorder %s15, 1
    %p138 = por %p136, %p137
    %p139 = scmp.ne.s32.totalorder %s128, %s129
    %p140 = scmp.eq.s32.totalorder %s15, 0
    %p141 = por %p139, %p140
    %p142 = scmp.ne.s32.totalorder %s128, %s129
    %p143 = scmp.eq.s32.totalorder %s16, 1
    %p144 = por %p142, %p143
    %p146 = scmp.ne.s32.totalorder %s129, %s145
    %p147 = scmp.eq.s32.totalorder %s16, 0
    %p148 = por %p146, %p147
    %p149 = scmp.le.s32.totalorder 1, %s10
    %p150 = scmp.lt.s32.totalorder %s10, 3
    %p151 = pnand %p149, %p150
    %p152 = pneg %p151
    // Predicated region
    $region9: #{attnblock_forward.4} parent=5 // pred_check
      _
    $region10: #{attnblock_forward.4} parent=5 // pred_check_branch
      %154 = sbr.rel (%p151) target = $region12
    $region11: #{attnblock_forward.4} parent=5 // pred_region
      %s155 = ssub.s32 %s10, 1
      // Predicated region
      $region13: #{attnblock_forward.4} parent=11 // pred_check
        %p156 = pneg %p71
      $region14: #{attnblock_forward.4} parent=11 // pred_check_branch
        %158 = sbr.rel (%p156) target = $region16
      $region15: #{attnblock_forward.4} parent=11 // pred_region
        _
      $region16: #{attnblock_forward.4} parent=11 // pred_fallthru
        _
      // Predicated region
      $region17: #{attnblock_forward.4} parent=11 // pred_check
        %p159 = pneg %p92
      $region18: #{attnblock_forward.4} parent=11 // pred_check_branch
        %161 = sbr.rel (%p159) target = $region20
      $region19: #{attnblock_forward.4} parent=11 // pred_region
        _
      $region20: #{attnblock_forward.4} parent=11 // pred_fallthru
        _
      // Predicated region
      $region21: #{attnblock_forward.4} parent=11 // pred_check
        %p162 = pneg %p113
      $region22: #{attnblock_forward.4} parent=11 // pred_check_branch
        %164 = sbr.rel (%p162) target = $region24
      $region23: #{attnblock_forward.4} parent=11 // pred_region
        _
      $region24: #{attnblock_forward.4} parent=11 // pred_fallthru
        _
    $region12: #{attnblock_forward.4} parent=5 // pred_fallthru
      _
    %p165 = scmp.lt.s32.totalorder %s10, 2
    // Predicated region
    $region25: #{attnblock_forward.4} parent=5 // pred_check
      %p166 = pneg %p165
    $region26: #{attnblock_forward.4} parent=5 // pred_check_branch
      %168 = sbr.rel (%p166) target = $region28
    $region27: #{attnblock_forward.4} parent=5 // pred_region
      // Predicated region
      $region29: #{attnblock_forward.4} parent=27 // pred_check
        %p169 = pneg %p44
      $region30: #{attnblock_forward.4} parent=27 // pred_check_branch
        %171 = sbr.rel (%p169) target = $region32
      $region31: #{attnblock_forward.4} parent=27 // pred_region
        %s172 = smul.u32 2, %s18
        %p173 = scmp.lt.s32.totalorder %s17, 1
        %s174 = scalar_select %p173, %s17, 1
        %p175 = scmp.lt.s32.totalorder %s172, 1
        %s176 = scalar_select %p175, %s172, 1
        %s177 = smul.addr %s174, 18
        %s178 = sadd.s32 %s176, %s177
        %s179 = smul.addr %s178, 4
        %s180 = scalar_lea.vmem %s0, %s179
        %s181 = smul.u32 2, %s18
      $region32: #{attnblock_forward.4} parent=27 // pred_fallthru
        _
    $region28: #{attnblock_forward.4} parent=5 // pred_fallthru
      _
    %p182 = scmp.le.s32.totalorder 1, %s10
    %p183 = scmp.lt.s32.totalorder %s10, 3
    %p184 = pnand %p182, %p183
    %p185 = pneg %p184
    // Predicated region
    $region33: #{attnblock_forward.4} parent=5 // pred_check
      _
    $region34: #{attnblock_forward.4} parent=5 // pred_check_branch
      %187 = sbr.rel (%p184) target = $region36
    $region35: #{attnblock_forward.4} parent=5 // pred_region
      %s188 = ssub.s32 %s10, 1
      %s189 = smul.u32 2, %s20
      %p190 = scmp.lt.s32.totalorder %s19, 1
      %s191 = scalar_select %p190, %s19, 1
      %p192 = scmp.lt.s32.totalorder %s189, 1
      %s193 = scalar_select %p192, %s189, 1
      %s194 = smul.addr %s191, 18
      %s195 = sadd.s32 %s193, %s194
      %s196 = smul.addr %s195, 4
      %s197 = scalar_lea.vmem %s0, %s196
      %p198 = pneg %p50
      %p199 = pneg %p47
      %p200 = pneg %p71
      %p201 = pneg %p68
      %p202 = pneg %p92
      %p203 = pneg %p89
      %p204 = pneg %p113
      %p205 = pneg %p110
      %p206 = pneg %p141
      %p207 = pneg %p138
      %s208 = smul.u32 2, %s20
      %p209 = scmp.lt.s32.totalorder %s19, 1
      %s210 = scalar_select %p209, %s19, 1
      %p211 = scmp.lt.s32.totalorder %s208, 1
      %s212 = scalar_select %p211, %s208, 1
      %s213 = smul.addr %s210, 2
      %s214 = sadd.s32 %s212, %s213
      %s215 = smul.addr %s214, 2
      %s216 = scalar_lea.vmem %s4, %s215
      %s217 = smul.u32 2, %s20
      %p218 = scmp.lt.s32.totalorder %s19, 1
      %s219 = scalar_select %p218, %s19, 1
      %p220 = scmp.lt.s32.totalorder %s217, 1
      %s221 = scalar_select %p220, %s217, 1
      %s222 = smul.addr %s219, 18
      %s223 = sadd.s32 %s221, %s222
      %s224 = smul.addr %s223, 4
      %s225 = scalar_lea.vmem %s0, %s224
      %s226 = smul.u32 2, %s20
      %s227 = smul.u32 2, %s20
      %p228 = scmp.lt.s32.totalorder %s19, 1
      %s229 = scalar_select %p228, %s19, 1
      %p230 = scmp.lt.s32.totalorder %s227, 1
      %s231 = scalar_select %p230, %s227, 1
      %s232 = smul.addr %s229, 2
      %s233 = sadd.s32 %s231, %s232
      %s234 = smul.addr %s233, 2
      %s235 = scalar_lea.vmem %s4, %s234
      %s236 = smul.u32 2, %s20
      %v238 = vld [vmem:[%s1] sm:$0x3]
      %v239 = vld [vmem:[%s225] sm:$0xff]
      %v240 = vld [vmem:[%s225 + $0x8] sm:$0xff]
      %v241 = vld [vmem:[%s225 + $0x10] sm:$0xff]
      %v242 = vld [vmem:[%s225 + $0x18] sm:$0xff]
      %v243 = vld [vmem:[%s225 + $0x20] sm:$0xff]
      %v244 = vld [vmem:[%s225 + $0x28] sm:$0xff]
      %v245 = vld [vmem:[%s225 + $0x30] sm:$0xff]
      %v246 = vld [vmem:[%s225 + $0x38] sm:$0xff]
      %v247 = vld [vmem:[%s225 + $0x40] sm:$0xff]
      %v257 = vunpack.c.l.b16 %v239
      %v258 = vunpack.c.h.b16 %v239
      %v259 = vunpack.c.l.b16 %v240
      %v260 = vunpack.c.h.b16 %v240
      %v261 = vunpack.c.l.b16 %v241
      %v262 = vunpack.c.h.b16 %v241
      %v263 = vunpack.c.l.b16 %v242
      %v264 = vunpack.c.h.b16 %v242
      %v265 = vunpack.c.l.b16 %v243
      %v266 = vunpack.c.h.b16 %v243
      %v267 = vunpack.c.l.b16 %v244
      %v268 = vunpack.c.h.b16 %v244
      %v269 = vunpack.c.l.b16 %v245
      %v270 = vunpack.c.h.b16 %v245
      %v271 = vunpack.c.l.b16 %v246
      %v272 = vunpack.c.h.b16 %v246
      %v273 = vunpack.c.l.b16 %v247
      %v274 = vunpack.c.h.b16 %v247
      %v275 = vpack.c.b16 %v259, %v257
      %v276 = vpack.c.b16 %v260, %v258
      %v277 = vpack.c.b16 %v263, %v261
      %v278 = vpack.c.b16 %v264, %v262
      %v279 = vpack.c.b16 %v267, %v265
      %v280 = vpack.c.b16 %v268, %v266
      %v281 = vpack.c.b16 %v271, %v269
      %v282 = vpack.c.b16 %v272, %v270
      %v283 = vpack.c.b16 %v273, %v273
      %v284 = vpack.c.b16 %v274, %v274
      %vm293 = vcmask 588800
      %v295 = vsel %vm293, %v238, 0
      %vm297 = vcmask 1043456
      %v299 = vsel %vm297, %v283, 0
      %v302 = vsel %vm297, %v284, 0
      %304 = vmatpush.bf16.msra.mxu0 0
      %305 = vmatpush.bf16.msra.mxu0 0
      %306 = vmatpush.bf16.msra.mxu0 0
      %307 = vmatpush.bf16.msra.mxu0 %v299
      %308 = vmatpush.bf16.msra.mxu0 %v281
      %309 = vmatpush.bf16.msra.mxu0 %v279
      %310 = vmatpush.bf16.msra.mxu0 %v277
      %311 = vmatpush.bf16.msra.mxu0 %v275
      %312 = vmatmul.bf16.gmra.mxu0 %v295
      %v313 = vpop.f32.mrf.mxu0
      %v314 = vadd.f32 0.0, %v313
      %v315 = vpop.f32.mrf.mxu0
      %316 = vdwg.mxu0
      %317 = vmatpush.bf16.msra.mxu0 0
      %318 = vmatpush.bf16.msra.mxu0 0
      %319 = vmatpush.bf16.msra.mxu0 0
      %320 = vmatpush.bf16.msra.mxu0 %v302
      %321 = vmatpush.bf16.msra.mxu0 %v282
      %322 = vmatpush.bf16.msra.mxu0 %v280
      %323 = vmatpush.bf16.msra.mxu0 %v278
      %324 = vmatpush.bf16.msra.mxu0 %v276
      %325 = vmatmul.bf16.gmra.mxu0 %v295
      %v326 = vpop.f32.mrf.mxu0
      %v327 = vadd.f32 0.0, %v326
      %v328 = vpop.f32.mrf.mxu0
      %329 = vdwg.mxu0
      %v330 = vld [vmem:[%s2] sm:$0xf]
      %332 = vset.pattern.permute.xlu0 0
      %333 = vperm.xlu0 %332, %v330
      %v334 = vpop.permute.xlu0 %333
      %v336 = vmul.f32 %v314, %v334
      %v337 = vmul.f32 %v327, %v334
      %v338 = vld [vmem:[%s3] sm:$0xf]
      %340 = vset.pattern.permute.xlu0 0
      %341 = vperm.xlu0 %340, %v338
      %v342 = vpop.permute.xlu0 %341
      %v344 = vadd.f32 %v336, %v342
      %v345 = vadd.f32 %v337, %v342
      %v346 = vmax.f32 %v344, 0.0
      %v347 = vmax.f32 %v345, 0.0
      %v348 = vpack.c.bf16 %v347, %v346
      %v350 = vrot.slane %v348, 2
      %vm351 = vcmask 1041408
      %v354 = vsel %vm351, %v348, %v350
      %356 = vst [vmem:[%s235] sm:$0xf] %v354
      %s357 = smul.u32 2, %s20
      %p358 = scmp.lt.s32.totalorder %s19, 1
      %s359 = scalar_select %p358, %s19, 1
      %p360 = scmp.lt.s32.totalorder %s357, 1
      %s361 = scalar_select %p360, %s357, 1
      %s362 = smul.addr %s359, 2
      %s363 = sadd.s32 %s361, %s362
      %s364 = smul.addr %s363, 2
      %s365 = scalar_lea.vmem %s4, %s364
      // Predicated region
      $region37: #{attnblock_forward.4} parent=35 // pred_check
        %p366 = pneg %p138
      $region38: #{attnblock_forward.4} parent=35 // pred_check_branch
        %368 = sbr.rel (%p366) target = $region40
      $region39: #{attnblock_forward.4} parent=35 // pred_region
        %s369 = smul.u32 2, %s20
      $region40: #{attnblock_forward.4} parent=35 // pred_fallthru
        _
    $region36: #{attnblock_forward.4} parent=5 // pred_fallthru
      _
    %p370 = scmp.le.s32.totalorder 2, %s10
    // Predicated region
    $region41: #{attnblock_forward.4} parent=5 // pred_check
      %p371 = pneg %p370
    $region42: #{attnblock_forward.4} parent=5 // pred_check_branch
      %373 = sbr.rel (%p371) target = $region44
    $region43: #{attnblock_forward.4} parent=5 // pred_region
      %s374 = ssub.s32 %s10, 2
      // Predicated region
      $region45: #{attnblock_forward.4} parent=43 // pred_check
        %p375 = pneg %p144
      $region46: #{attnblock_forward.4} parent=43 // pred_check_branch
        %377 = sbr.rel (%p375) target = $region48
      $region47: #{attnblock_forward.4} parent=43 // pred_region
        %s378 = smul.u32 2, %s22
        %p379 = scmp.lt.s32.totalorder %s21, 1
        %s380 = scalar_select %p379, %s21, 1
        %p381 = scmp.lt.s32.totalorder %s378, 1
        %s382 = scalar_select %p381, %s378, 1
        %s383 = smul.addr %s380, 2
        %s384 = sadd.s32 %s382, %s383
        %s385 = smul.addr %s384, 2
        %s386 = scalar_lea.vmem %s4, %s385
      $region48: #{attnblock_forward.4} parent=43 // pred_fallthru
        _
    $region44: #{attnblock_forward.4} parent=5 // pred_fallthru
      _
  $region6: #{attnblock_forward.4} parent=0 // loop_footer
    %s14 = sadd.s32 1, %s10
  $region7: #{attnblock_forward.4} parent=0 // loop_footer_branch
    %9 = sbr.rel target = $region3
  $region8: #{attnblock_forward.4} parent=0 // loop_exit
    _

// kernel: attnblock_forward.5
$region0: #{attnblock_forward.5}
  #allocation0 [shape = 'u32[]', space=smem, size = 0x4, offset = 0x4, fixed_abs, tag = 'smem constant byte address 0x4 - core index']
  #allocation1 [shape = 'u32[72,128]{1,0:T(1,128)}', space=vmem, size = 0x9000, scoped, tag = 'internal scratch']
  #allocation2 [shape = 'f32[1,1]{1,0:T(1,128)S(1)}', space=vmem, size = 0x200, scoped, tag = 'scoped memory for attnblock_forward.5']
  #allocation3 [shape = 'f32[1,1]{1,0:T(1,128)S(1)}', space=vmem, size = 0x200, scoped, tag = 'scoped memory for attnblock_forward.5']
  %s0 = inlined_call_operand.vmem [shape: bf16[2,36,256], index: 0, kind: input, shape index: {}]
  %s1 = inlined_call_operand.vmem [shape: bf16[2,4,256], index: 1, kind: input, shape index: {}]
  %s2 = inlined_call_operand.vmem [shape: bf16[4,36], index: 2, kind: input, shape index: {}]
  %s3 = inlined_call_operand.vmem [shape: f32[4,1], index: 3, kind: input, shape index: {}]
  %s4 = inlined_call_operand.vmem [shape: f32[4,1], index: 4, kind: input, shape index: {}]
  %s5 = inlined_call_operand.vmem [shape: f32[2,4], index: 5, kind: input, shape index: {}]
  %s6 = inlined_call_operand.vmem [shape: f32[2,1], index: 6, kind: input, shape index: {}]
  %s7 = inlined_call_operand.vmem [shape: f32[4,2], index: 7, kind: input, shape index: {}]
  %s8 = inlined_call_operand.vmem [shape: f32[4,1], index: 8, kind: input, shape index: {}]
  %s9 = inlined_call_operand.vmem [shape: bf16[4,4], index: 9, kind: input, shape index: {}]
  %s10 = inlined_call_operand.vmem [shape: f32[4,1], index: 10, kind: input, shape index: {}]
  %s11 = inlined_call_operand.vmem [shape: f32[4,1], index: 11, kind: input, shape index: {}]
  %s12 = inlined_call_operand.vmem [shape: f32[2,1], index: 12, kind: input, shape index: {}]
  %s13 = inlined_call_operand.<no memory space> [shape: f32[1,1], index: 13, kind: input, shape index: {}]
  %s14 = inlined_call_operand.<no memory space> [shape: f32[1,1], index: 14, kind: input, shape index: {}]
  %s15 = inlined_call_operand.vmem [shape: bf16[2,4], index: 15, kind: input, shape index: {}]
  %s16 = inlined_call_operand.vmem [shape: f32[2,1], index: 16, kind: input, shape index: {}]
  %s17 = inlined_call_operand.vmem [shape: f32[2,1], index: 17, kind: input, shape index: {}]
  %s18 = inlined_call_operand.vmem [shape: bf16[4,2], index: 18, kind: input, shape index: {}]
  %s19 = inlined_call_operand.vmem [shape: f32[4,1], index: 19, kind: input, shape index: {}]
  %s20 = inlined_call_operand.vmem [shape: f32[4,1], index: 20, kind: input, shape index: {}]
  %s21 = inlined_call_operand.vmem [shape: f32[2,4,256], index: 21, kind: output, shape index: {}]
  %s22 = sld [smem:[#allocation0]]
  $region117: #{attnblock_forward.5} parent=0
    _
  %s24 = ssub.s32 1, %s22
  %s25 = scalar_select 0, %s24, %s22
  %v26 = vstv %s13
  %27 = vst [vmem:[#allocation2] sm:$0x1] %v26
  %v28 = vstv %s14
  %29 = vst [vmem:[#allocation3] sm:$0x1] %v28
  loop: start=0, step=1, limit=4
  $region2: #{attnblock_forward.5} parent=0 // loop_pre_header
    _
  $region3: #{attnblock_forward.5} parent=0 // loop_header
    %s31 = sphi 0, %s35
    %p32 = scmp.ge.s32.totalorder %s31, 4
    %s41 = sphi 0, %s43
    %s44 = sphi 0, %s41
    %s45 = sphi 0, %s44
    %s61 = sphi 0, %s45
    %s67 = sphi 0, %s69
    %s70 = sphi 0, %s67
    %s71 = sphi 0, %s70
    %s87 = sphi 0, %s71
    %s91 = sphi 0, %s91
    %s93 = sphi 0, %s91
    %s94 = sphi 0, %s93
    %s108 = sphi 0, %s94
    %s112 = sphi 0, %s112
    %s114 = sphi 0, %s112
    %s115 = sphi 0, %s114
    %s129 = sphi 0, %s115
    %s133 = sphi 0, %s133
    %s135 = sphi 0, %s133
    %s136 = sphi 0, %s135
    %s150 = sphi 0, %s136
    %s154 = sphi 0, %s154
    %s156 = sphi 0, %s154
    %s157 = sphi 0, %s156
    %s171 = sphi 0, %s157
    %s175 = sphi 0, %s175
    %s177 = sphi 0, %s175
    %s178 = sphi 0, %s177
    %s192 = sphi 0, %s178
    %s196 = sphi 0, %s196
    %s198 = sphi 0, %s196
    %s199 = sphi 0, %s198
    %s213 = sphi 0, %s199
    %s217 = sphi 0, %s217
    %s219 = sphi 0, %s217
    %s220 = sphi 0, %s219
    %s234 = sphi 0, %s220
    %s238 = sphi 0, %s238
    %s240 = sphi 0, %s238
    %s241 = sphi 0, %s240
    %s255 = sphi 0, %s241
    %s259 = sphi 0, %s259
    %s261 = sphi 0, %s259
    %s262 = sphi 0, %s261
    %s276 = sphi 0, %s262
    %s280 = sphi 0, %s280
    %s282 = sphi 0, %s280
    %s283 = sphi 0, %s282
    %s297 = sphi 0, %s283
    %s301 = sphi 0, %s301
    %s303 = sphi 0, %s301
    %s304 = sphi 0, %s303
    %s318 = sphi 0, %s304
    %s322 = sphi 0, %s322
    %s324 = sphi 0, %s322
    %s325 = sphi 0, %s324
    %s339 = sphi 0, %s325
    %s343 = sphi 0, %s343
    %s345 = sphi 0, %s343
    %s346 = sphi 0, %s345
    %s360 = sphi 0, %s346
    %s364 = sphi 0, %s364
    %s366 = sphi 0, %s364
    %s367 = sphi 0, %s366
    %s381 = sphi 0, %s367
    %s385 = sphi 0, %s385
    %s387 = sphi 0, %s385
    %s388 = sphi 0, %s387
    %s402 = sphi 0, %s388
    %s406 = sphi 0, %s406
    %s408 = sphi 0, %s406
    %s409 = sphi 0, %s408
    %s423 = sphi 0, %s409
    %s427 = sphi 0, %s427
    %s429 = sphi 0, %s427
    %s430 = sphi 0, %s429
    %s444 = sphi 0, %s430
    %s448 = sphi 0, %s448
    %s450 = sphi 0, %s448
    %s451 = sphi 0, %s450
    %s465 = sphi 0, %s451
    %s469 = sphi 0, %s469
    %s471 = sphi 0, %s469
    %s472 = sphi 0, %s471
    %s486 = sphi 0, %s472
    %s492 = sphi 0, %s494
    %s495 = sphi 0, %s492
    %s496 = sphi 0, %s495
    %s512 = sphi 0, %s496
  $region4: #{attnblock_forward.5} parent=0 // loop_header_branch
    %34 = sbr.rel (%p32) target = $region8
  $region5: #{attnblock_forward.5} parent=0 // loop_body
    %s36 = ssub.s32 %s31, 1
    %s37 = ssub.s32 %s31, 2
    %s38 = sadd.s32 %s31, 1
    %s39 = ssub.s32 %s31, %s38
    %p40 = scmp.eq.s32.totalorder %s39, 0
    %s42 = sadd.s32 %s41, 1
    %s43 = scalar_select %p40, %s41, %s42
    %p46 = pneg %p40
    %p47 = scmp.eq.s32.totalorder %s31, 1
    %p48 = por %p46, %p47
    %p49 = scmp.ne.s32.totalorder %s41, %s44
    %p50 = scmp.eq.s32.totalorder %s31, 0
    %p51 = por %p49, %p50
    %p52 = scmp.ne.s32.totalorder %s41, %s44
    %p53 = scmp.eq.s32.totalorder %s36, 1
    %p54 = por %p52, %p53
    %p55 = scmp.ne.s32.totalorder %s44, %s45
    %p56 = scmp.eq.s32.totalorder %s36, 0
    %p57 = por %p55, %p56
    %p58 = scmp.ne.s32.totalorder %s44, %s45
    %p59 = scmp.eq.s32.totalorder %s37, 1
    %p60 = por %p58, %p59
    %p62 = scmp.ne.s32.totalorder %s45, %s61
    %p63 = scmp.eq.s32.totalorder %s37, 0
    %p64 = por %p62, %p63
    %s65 = ssub.s32 %s31, %s38
    %p66 = scmp.eq.s32.totalorder %s65, 0
    %s68 = sadd.s32 %s67, 1
    %s69 = scalar_select %p66, %s67, %s68
    %p72 = pneg %p66
    %p73 = scmp.eq.s32.totalorder %s31, 1
    %p74 = por %p72, %p73
    %p75 = scmp.ne.s32.totalorder %s67, %s70
    %p76 = scmp.eq.s32.totalorder %s31, 0
    %p77 = por %p75, %p76
    %p78 = scmp.ne.s32.totalorder %s67, %s70
    %p79 = scmp.eq.s32.totalorder %s36, 1
    %p80 = por %p78, %p79
    %p81 = scmp.ne.s32.totalorder %s70, %s71
    %p82 = scmp.eq.s32.totalorder %s36, 0
    %p83 = por %p81, %p82
    %p84 = scmp.ne.s32.totalorder %s70, %s71
    %p85 = scmp.eq.s32.totalorder %s37, 1
    %p86 = por %p84, %p85
    %p88 = scmp.ne.s32.totalorder %s71, %s87
    %p89 = scmp.eq.s32.totalorder %s37, 0
    %p90 = por %p88, %p89
    %s92 = sadd.s32 %s91, 1
    %p95 = scmp.eq.s32.totalorder %s31, 1
    %p96 = scmp.ne.s32.totalorder %s91, %s93
    %p97 = scmp.eq.s32.totalorder %s31, 0
    %p98 = por %p96, %p97
    %p99 = scmp.ne.s32.totalorder %s91, %s93
    %p100 = scmp.eq.s32.totalorder %s36, 1
    %p101 = por %p99, %p100
    %p102 = scmp.ne.s32.totalorder %s93, %s94
    %p103 = scmp.eq.s32.totalorder %s36, 0
    %p104 = por %p102, %p103
    %p105 = scmp.ne.s32.totalorder %s93, %s94
    %p106 = scmp.eq.s32.totalorder %s37, 1
    %p107 = por %p105, %p106
    %p109 = scmp.ne.s32.totalorder %s94, %s108
    %p110 = scmp.eq.s32.totalorder %s37, 0
    %p111 = por %p109, %p110
    %s113 = sadd.s32 %s112, 1
    %p116 = scmp.eq.s32.totalorder %s31, 1
    %p117 = scmp.ne.s32.totalorder %s112, %s114
    %p118 = scmp.eq.s32.totalorder %s31, 0
    %p119 = por %p117, %p118
    %p120 = scmp.ne.s32.totalorder %s112, %s114
    %p121 = scmp.eq.s32.totalorder %s36, 1
    %p122 = por %p120, %p121
    %p123 = scmp.ne.s32.totalorder %s114, %s115
    %p124 = scmp.eq.s32.totalorder %s36, 0
    %p125 = por %p123, %p124
    %p126 = scmp.ne.s32.totalorder %s114, %s115
    %p127 = scmp.eq.s32.totalorder %s37, 1
    %p128 = por %p126, %p127
    %p130 = scmp.ne.s32.totalorder %s115, %s129
    %p131 = scmp.eq.s32.totalorder %s37, 0
    %p132 = por %p130, %p131
    %s134 = sadd.s32 %s133, 1
    %p137 = scmp.eq.s32.totalorder %s31, 1
    %p138 = scmp.ne.s32.totalorder %s133, %s135
    %p139 = scmp.eq.s32.totalorder %s31, 0
    %p140 = por %p138, %p139
    %p141 = scmp.ne.s32.totalorder %s133, %s135
    %p142 = scmp.eq.s32.totalorder %s36, 1
    %p143 = por %p141, %p142
    %p144 = scmp.ne.s32.totalorder %s135, %s136
    %p145 = scmp.eq.s32.totalorder %s36, 0
    %p146 = por %p144, %p145
    %p147 = scmp.ne.s32.totalorder %s135, %s136
    %p148 = scmp.eq.s32.totalorder %s37, 1
    %p149 = por %p147, %p148
    %p151 = scmp.ne.s32.totalorder %s136, %s150
    %p152 = scmp.eq.s32.totalorder %s37, 0
    %p153 = por %p151, %p152
    %s155 = sadd.s32 %s154, 1
    %p158 = scmp.eq.s32.totalorder %s31, 1
    %p159 = scmp.ne.s32.totalorder %s154, %s156
    %p160 = scmp.eq.s32.totalorder %s31, 0
    %p161 = por %p159, %p160
    %p162 = scmp.ne.s32.totalorder %s154, %s156
    %p163 = scmp.eq.s32.totalorder %s36, 1
    %p164 = por %p162, %p163
    %p165 = scmp.ne.s32.totalorder %s156, %s157
    %p166 = scmp.eq.s32.totalorder %s36, 0
    %p167 = por %p165, %p166
    %p168 = scmp.ne.s32.totalorder %s156, %s157
    %p169 = scmp.eq.s32.totalorder %s37, 1
    %p170 = por %p168, %p169
    %p172 = scmp.ne.s32.totalorder %s157, %s171
    %p173 = scmp.eq.s32.totalorder %s37, 0
    %p174 = por %p172, %p173
    %s176 = sadd.s32 %s175, 1
    %p179 = scmp.eq.s32.totalorder %s31, 1
    %p180 = scmp.ne.s32.totalorder %s175, %s177
    %p181 = scmp.eq.s32.totalorder %s31, 0
    %p182 = por %p180, %p181
    %p183 = scmp.ne.s32.totalorder %s175, %s177
    %p184 = scmp.eq.s32.totalorder %s36, 1
    %p185 = por %p183, %p184
    %p186 = scmp.ne.s32.totalorder %s177, %s178
    %p187 = scmp.eq.s32.totalorder %s36, 0
    %p188 = por %p186, %p187
    %p189 = scmp.ne.s32.totalorder %s177, %s178
    %p190 = scmp.eq.s32.totalorder %s37, 1
    %p191 = por %p189, %p190
    %p193 = scmp.ne.s32.totalorder %s178, %s192
    %p194 = scmp.eq.s32.totalorder %s37, 0
    %p195 = por %p193, %p194
    %s197 = sadd.s32 %s196, 1
    %p200 = scmp.eq.s32.totalorder %s31, 1
    %p201 = scmp.ne.s32.totalorder %s196, %s198
    %p202 = scmp.eq.s32.totalorder %s31, 0
    %p203 = por %p201, %p202
    %p204 = scmp.ne.s32.totalorder %s196, %s198
    %p205 = scmp.eq.s32.totalorder %s36, 1
    %p206 = por %p204, %p205
    %p207 = scmp.ne.s32.totalorder %s198, %s199
    %p208 = scmp.eq.s32.totalorder %s36, 0
    %p209 = por %p207, %p208
    %p210 = scmp.ne.s32.totalorder %s198, %s199
    %p211 = scmp.eq.s32.totalorder %s37, 1
    %p212 = por %p210, %p211
    %p214 = scmp.ne.s32.totalorder %s199, %s213
    %p215 = scmp.eq.s32.totalorder %s37, 0
    %p216 = por %p214, %p215
    %s218 = sadd.s32 %s217, 1
    %p221 = scmp.eq.s32.totalorder %s31, 1
    %p222 = scmp.ne.s32.totalorder %s217, %s219
    %p223 = scmp.eq.s32.totalorder %s31, 0
    %p224 = por %p222, %p223
    %p225 = scmp.ne.s32.totalorder %s217, %s219
    %p226 = scmp.eq.s32.totalorder %s36, 1
    %p227 = por %p225, %p226
    %p228 = scmp.ne.s32.totalorder %s219, %s220
    %p229 = scmp.eq.s32.totalorder %s36, 0
    %p230 = por %p228, %p229
    %p231 = scmp.ne.s32.totalorder %s219, %s220
    %p232 = scmp.eq.s32.totalorder %s37, 1
    %p233 = por %p231, %p232
    %p235 = scmp.ne.s32.totalorder %s220, %s234
    %p236 = scmp.eq.s32.totalorder %s37, 0
    %p237 = por %p235, %p236
    %s239 = sadd.s32 %s238, 1
    %p242 = scmp.eq.s32.totalorder %s31, 1
    %p243 = scmp.ne.s32.totalorder %s238, %s240
    %p244 = scmp.eq.s32.totalorder %s31, 0
    %p245 = por %p243, %p244
    %p246 = scmp.ne.s32.totalorder %s238, %s240
    %p247 = scmp.eq.s32.totalorder %s36, 1
    %p248 = por %p246, %p247
    %p249 = scmp.ne.s32.totalorder %s240, %s241
    %p250 = scmp.eq.s32.totalorder %s36, 0
    %p251 = por %p249, %p250
    %p252 = scmp.ne.s32.totalorder %s240, %s241
    %p253 = scmp.eq.s32.totalorder %s37, 1
    %p254 = por %p252, %p253
    %p256 = scmp.ne.s32.totalorder %s241, %s255
    %p257 = scmp.eq.s32.totalorder %s37, 0
    %p258 = por %p256, %p257
    %s260 = sadd.s32 %s259, 1
    %p263 = scmp.eq.s32.totalorder %s31, 1
    %p264 = scmp.ne.s32.totalorder %s259, %s261
    %p265 = scmp.eq.s32.totalorder %s31, 0
    %p266 = por %p264, %p265
    %p267 = scmp.ne.s32.totalorder %s259, %s261
    %p268 = scmp.eq.s32.totalorder %s36, 1
    %p269 = por %p267, %p268
    %p270 = scmp.ne.s32.totalorder %s261, %s262
    %p271 = scmp.eq.s32.totalorder %s36, 0
    %p272 = por %p270, %p271
    %p273 = scmp.ne.s32.totalorder %s261, %s262
    %p274 = scmp.eq.s32.totalorder %s37, 1
    %p275 = por %p273, %p274
    %p277 = scmp.ne.s32.totalorder %s262, %s276
    %p278 = scmp.eq.s32.totalorder %s37, 0
    %p279 = por %p277, %p278
    %s281 = sadd.s32 %s280, 1
    %p284 = scmp.eq.s32.totalorder %s31, 1
    %p285 = scmp.ne.s32.totalorder %s280, %s282
    %p286 = scmp.eq.s32.totalorder %s31, 0
    %p287 = por %p285, %p286
    %p288 = scmp.ne.s32.totalorder %s280, %s282
    %p289 = scmp.eq.s32.totalorder %s36, 1
    %p290 = por %p288, %p289
    %p291 = scmp.ne.s32.totalorder %s282, %s283
    %p292 = scmp.eq.s32.totalorder %s36, 0
    %p293 = por %p291, %p292
    %p294 = scmp.ne.s32.totalorder %s282, %s283
    %p295 = scmp.eq.s32.totalorder %s37, 1
    %p296 = por %p294, %p295
    %p298 = scmp.ne.s32.totalorder %s283, %s297
    %p299 = scmp.eq.s32.totalorder %s37, 0
    %p300 = por %p298, %p299
    %s302 = sadd.s32 %s301, 1
    %p305 = scmp.eq.s32.totalorder %s31, 1
    %p306 = scmp.ne.s32.totalorder %s301, %s303
    %p307 = scmp.eq.s32.totalorder %s31, 0
    %p308 = por %p306, %p307
    %p309 = scmp.ne.s32.totalorder %s301, %s303
    %p310 = scmp.eq.s32.totalorder %s36, 1
    %p311 = por %p309, %p310
    %p312 = scmp.ne.s32.totalorder %s303, %s304
    %p313 = scmp.eq.s32.totalorder %s36, 0
    %p314 = por %p312, %p313
    %p315 = scmp.ne.s32.totalorder %s303, %s304
    %p316 = scmp.eq.s32.totalorder %s37, 1
    %p317 = por %p315, %p316
    %p319 = scmp.ne.s32.totalorder %s304, %s318
    %p320 = scmp.eq.s32.totalorder %s37, 0
    %p321 = por %p319, %p320
    %s323 = sadd.s32 %s322, 1
    %p326 = scmp.eq.s32.totalorder %s31, 1
    %p327 = scmp.ne.s32.totalorder %s322, %s324
    %p328 = scmp.eq.s32.totalorder %s31, 0
    %p329 = por %p327, %p328
    %p330 = scmp.ne.s32.totalorder %s322, %s324
    %p331 = scmp.eq.s32.totalorder %s36, 1
    %p332 = por %p330, %p331
    %p333 = scmp.ne.s32.totalorder %s324, %s325
    %p334 = scmp.eq.s32.totalorder %s36, 0
    %p335 = por %p333, %p334
    %p336 = scmp.ne.s32.totalorder %s324, %s325
    %p337 = scmp.eq.s32.totalorder %s37, 1
    %p338 = por %p336, %p337
    %p340 = scmp.ne.s32.totalorder %s325, %s339
    %p341 = scmp.eq.s32.totalorder %s37, 0
    %p342 = por %p340, %p341
    %s344 = sadd.s32 %s343, 1
    %p347 = scmp.eq.s32.totalorder %s31, 1
    %p348 = scmp.ne.s32.totalorder %s343, %s345
    %p349 = scmp.eq.s32.totalorder %s31, 0
    %p350 = por %p348, %p349
    %p351 = scmp.ne.s32.totalorder %s343, %s345
    %p352 = scmp.eq.s32.totalorder %s36, 1
    %p353 = por %p351, %p352
    %p354 = scmp.ne.s32.totalorder %s345, %s346
    %p355 = scmp.eq.s32.totalorder %s36, 0
    %p356 = por %p354, %p355
    %p357 = scmp.ne.s32.totalorder %s345, %s346
    %p358 = scmp.eq.s32.totalorder %s37, 1
    %p359 = por %p357, %p358
    %p361 = scmp.ne.s32.totalorder %s346, %s360
    %p362 = scmp.eq.s32.totalorder %s37, 0
    %p363 = por %p361, %p362
    %s365 = sadd.s32 %s364, 1
    %p368 = scmp.eq.s32.totalorder %s31, 1
    %p369 = scmp.ne.s32.totalorder %s364, %s366
    %p370 = scmp.eq.s32.totalorder %s31, 0
    %p371 = por %p369, %p370
    %p372 = scmp.ne.s32.totalorder %s364, %s366
    %p373 = scmp.eq.s32.totalorder %s36, 1
    %p374 = por %p372, %p373
    %p375 = scmp.ne.s32.totalorder %s366, %s367
    %p376 = scmp.eq.s32.totalorder %s36, 0
    %p377 = por %p375, %p376
    %p378 = scmp.ne.s32.totalorder %s366, %s367
    %p379 = scmp.eq.s32.totalorder %s37, 1
    %p380 = por %p378, %p379
    %p382 = scmp.ne.s32.totalorder %s367, %s381
    %p383 = scmp.eq.s32.totalorder %s37, 0
    %p384 = por %p382, %p383
    %s386 = sadd.s32 %s385, 1
    %p389 = scmp.eq.s32.totalorder %s31, 1
    %p390 = scmp.ne.s32.totalorder %s385, %s387
    %p391 = scmp.eq.s32.totalorder %s31, 0
    %p392 = por %p390, %p391
    %p393 = scmp.ne.s32.totalorder %s385, %s387
    %p394 = scmp.eq.s32.totalorder %s36, 1
    %p395 = por %p393, %p394
    %p396 = scmp.ne.s32.totalorder %s387, %s388
    %p397 = scmp.eq.s32.totalorder %s36, 0
    %p398 = por %p396, %p397
    %p399 = scmp.ne.s32.totalorder %s387, %s388
    %p400 = scmp.eq.s32.totalorder %s37, 1
    %p401 = por %p399, %p400
    %p403 = scmp.ne.s32.totalorder %s388, %s402
    %p404 = scmp.eq.s32.totalorder %s37, 0
    %p405 = por %p403, %p404
    %s407 = sadd.s32 %s406, 1
    %p410 = scmp.eq.s32.totalorder %s31, 1
    %p411 = scmp.ne.s32.totalorder %s406, %s408
    %p412 = scmp.eq.s32.totalorder %s31, 0
    %p413 = por %p411, %p412
    %p414 = scmp.ne.s32.totalorder %s406, %s408
    %p415 = scmp.eq.s32.totalorder %s36, 1
    %p416 = por %p414, %p415
    %p417 = scmp.ne.s32.totalorder %s408, %s409
    %p418 = scmp.eq.s32.totalorder %s36, 0
    %p419 = por %p417, %p418
    %p420 = scmp.ne.s32.totalorder %s408, %s409
    %p421 = scmp.eq.s32.totalorder %s37, 1
    %p422 = por %p420, %p421
    %p424 = scmp.ne.s32.totalorder %s409, %s423
    %p425 = scmp.eq.s32.totalorder %s37, 0
    %p426 = por %p424, %p425
    %s428 = sadd.s32 %s427, 1
    %p431 = scmp.eq.s32.totalorder %s31, 1
    %p432 = scmp.ne.s32.totalorder %s427, %s429
    %p433 = scmp.eq.s32.totalorder %s31, 0
    %p434 = por %p432, %p433
    %p435 = scmp.ne.s32.totalorder %s427, %s429
    %p436 = scmp.eq.s32.totalorder %s36, 1
    %p437 = por %p435, %p436
    %p438 = scmp.ne.s32.totalorder %s429, %s430
    %p439 = scmp.eq.s32.totalorder %s36, 0
    %p440 = por %p438, %p439
    %p441 = scmp.ne.s32.totalorder %s429, %s430
    %p442 = scmp.eq.s32.totalorder %s37, 1
    %p443 = por %p441, %p442
    %p445 = scmp.ne.s32.totalorder %s430, %s444
    %p446 = scmp.eq.s32.totalorder %s37, 0
    %p447 = por %p445, %p446
    %s449 = sadd.s32 %s448, 1
    %p452 = scmp.eq.s32.totalorder %s31, 1
    %p453 = scmp.ne.s32.totalorder %s448, %s450
    %p454 = scmp.eq.s32.totalorder %s31, 0
    %p455 = por %p453, %p454
    %p456 = scmp.ne.s32.totalorder %s448, %s450
    %p457 = scmp.eq.s32.totalorder %s36, 1
    %p458 = por %p456, %p457
    %p459 = scmp.ne.s32.totalorder %s450, %s451
    %p460 = scmp.eq.s32.totalorder %s36, 0
    %p461 = por %p459, %p460
    %p462 = scmp.ne.s32.totalorder %s450, %s451
    %p463 = scmp.eq.s32.totalorder %s37, 1
    %p464 = por %p462, %p463
    %p466 = scmp.ne.s32.totalorder %s451, %s465
    %p467 = scmp.eq.s32.totalorder %s37, 0
    %p468 = por %p466, %p467
    %s470 = sadd.s32 %s469, 1
    %p473 = scmp.eq.s32.totalorder %s31, 1
    %p474 = scmp.ne.s32.totalorder %s469, %s471
    %p475 = scmp.eq.s32.totalorder %s31, 0
    %p476 = por %p474, %p475
    %p477 = scmp.ne.s32.totalorder %s469, %s471
    %p478 = scmp.eq.s32.totalorder %s36, 1
    %p479 = por %p477, %p478
    %p480 = scmp.ne.s32.totalorder %s471, %s472
    %p481 = scmp.eq.s32.totalorder %s36, 0
    %p482 = por %p480, %p481
    %p483 = scmp.ne.s32.totalorder %s471, %s472
    %p484 = scmp.eq.s32.totalorder %s37, 1
    %p485 = por %p483, %p484
    %p487 = scmp.ne.s32.totalorder %s472, %s486
    %p488 = scmp.eq.s32.totalorder %s37, 0
    %p489 = por %p487, %p488
    %s490 = ssub.s32 %s31, %s38
    %p491 = scmp.eq.s32.totalorder %s490, 0
    %s493 = sadd.s32 %s492, 1
    %s494 = scalar_select %p491, %s492, %s493
    %p497 = pneg %p491
    %p498 = scmp.eq.s32.totalorder %s31, 1
    %p499 = por %p497, %p498
    %p500 = scmp.ne.s32.totalorder %s492, %s495
    %p501 = scmp.eq.s32.totalorder %s31, 0
    %p502 = por %p500, %p501
    %p503 = scmp.ne.s32.totalorder %s492, %s495
    %p504 = scmp.eq.s32.totalorder %s36, 1
    %p505 = por %p503, %p504
    %p506 = scmp.ne.s32.totalorder %s495, %s496
    %p507 = scmp.eq.s32.totalorder %s36, 0
    %p508 = por %p506, %p507
    %p509 = scmp.ne.s32.totalorder %s495, %s496
    %p510 = scmp.eq.s32.totalorder %s37, 1
    %p511 = por %p509, %p510
    %p513 = scmp.ne.s32.totalorder %s496, %s512
    %p514 = scmp.eq.s32.totalorder %s37, 0
    %p515 = por %p513, %p514
    %p516 = scmp.le.s32.totalorder 1, %s31
    %p517 = scmp.lt.s32.totalorder %s31, 3
    %p518 = pnand %p516, %p517
    %p519 = pneg %p518
    // Predicated region
    $region9: #{attnblock_forward.5} parent=5 // pred_check
      _
    $region10: #{attnblock_forward.5} parent=5 // pred_check_branch
      %521 = sbr.rel (%p518) target = $region12
    $region11: #{attnblock_forward.5} parent=5 // pred_region
      %s522 = ssub.s32 %s31, 1
      // Predicated region
      $region13: #{attnblock_forward.5} parent=11 // pred_check
        %p523 = pneg %p104
      $region14: #{attnblock_forward.5} parent=11 // pred_check_branch
        %525 = sbr.rel (%p523) target = $region16
      $region15: #{attnblock_forward.5} parent=11 // pred_region
        _
      $region16: #{attnblock_forward.5} parent=11 // pred_fallthru
        _
      // Predicated region
      $region17: #{attnblock_forward.5} parent=11 // pred_check
        %p526 = pneg %p125
      $region18: #{attnblock_forward.5} parent=11 // pred_check_branch
        %528 = sbr.rel (%p526) target = $region20
      $region19: #{attnblock_forward.5} parent=11 // pred_region
        _
      $region20: #{attnblock_forward.5} parent=11 // pred_fallthru
        _
      // Predicated region
      $region21: #{attnblock_forward.5} parent=11 // pred_check
        %p529 = pneg %p146
      $region22: #{attnblock_forward.5} parent=11 // pred_check_branch
        %531 = sbr.rel (%p529) target = $region24
      $region23: #{attnblock_forward.5} parent=11 // pred_region
        _
      $region24: #{attnblock_forward.5} parent=11 // pred_fallthru
        _
      // Predicated region
      $region25: #{attnblock_forward.5} parent=11 // pred_check
        %p532 = pneg %p167
      $region26: #{attnblock_forward.5} parent=11 // pred_check_branch
        %534 = sbr.rel (%p532) target = $region28
      $region27: #{attnblock_forward.5} parent=11 // pred_region
        _
      $region28: #{attnblock_forward.5} parent=11 // pred_fallthru
        _
      // Predicated region
      $region29: #{attnblock_forward.5} parent=11 // pred_check
        %p535 = pneg %p188
      $region30: #{attnblock_forward.5} parent=11 // pred_check_branch
        %537 = sbr.rel (%p535) target = $region32
      $region31: #{attnblock_forward.5} parent=11 // pred_region
        _
      $region32: #{attnblock_forward.5} parent=11 // pred_fallthru
        _
      // Predicated region
      $region33: #{attnblock_forward.5} parent=11 // pred_check
        %p538 = pneg %p209
      $region34: #{attnblock_forward.5} parent=11 // pred_check_branch
        %540 = sbr.rel (%p538) target = $region36
      $region35: #{attnblock_forward.5} parent=11 // pred_region
        _
      $region36: #{attnblock_forward.5} parent=11 // pred_fallthru
        _
      // Predicated region
      $region37: #{attnblock_forward.5} parent=11 // pred_check
        %p541 = pneg %p230
      $region38: #{attnblock_forward.5} parent=11 // pred_check_branch
        %543 = sbr.rel (%p541) target = $region40
      $region39: #{attnblock_forward.5} parent=11 // pred_region
        _
      $region40: #{attnblock_forward.5} parent=11 // pred_fallthru
        _
      // Predicated region
      $region41: #{attnblock_forward.5} parent=11 // pred_check
        %p544 = pneg %p251
      $region42: #{attnblock_forward.5} parent=11 // pred_check_branch
        %546 = sbr.rel (%p544) target = $region44
      $region43: #{attnblock_forward.5} parent=11 // pred_region
        _
      $region44: #{attnblock_forward.5} parent=11 // pred_fallthru
        _
      // Predicated region
      $region45: #{attnblock_forward.5} parent=11 // pred_check
        %p547 = pneg %p272
      $region46: #{attnblock_forward.5} parent=11 // pred_check_branch
        %549 = sbr.rel (%p547) target = $region48
      $region47: #{attnblock_forward.5} parent=11 // pred_region
        _
      $region48: #{attnblock_forward.5} parent=11 // pred_fallthru
        _
      // Predicated region
      $region49: #{attnblock_forward.5} parent=11 // pred_check
        %p550 = pneg %p293
      $region50: #{attnblock_forward.5} parent=11 // pred_check_branch
        %552 = sbr.rel (%p550) target = $region52
      $region51: #{attnblock_forward.5} parent=11 // pred_region
        _
      $region52: #{attnblock_forward.5} parent=11 // pred_fallthru
        _
      // Predicated region
      $region53: #{attnblock_forward.5} parent=11 // pred_check
        %p553 = pneg %p314
      $region54: #{attnblock_forward.5} parent=11 // pred_check_branch
        %555 = sbr.rel (%p553) target = $region56
      $region55: #{attnblock_forward.5} parent=11 // pred_region
        _
      $region56: #{attnblock_forward.5} parent=11 // pred_fallthru
        _
      // Predicated region
      $region57: #{attnblock_forward.5} parent=11 // pred_check
        %p556 = pneg %p335
      $region58: #{attnblock_forward.5} parent=11 // pred_check_branch
        %558 = sbr.rel (%p556) target = $region60
      $region59: #{attnblock_forward.5} parent=11 // pred_region
        _
      $region60: #{attnblock_forward.5} parent=11 // pred_fallthru
        _
      // Predicated region
      $region61: #{attnblock_forward.5} parent=11 // pred_check
        %p559 = pneg %p356
      $region62: #{attnblock_forward.5} parent=11 // pred_check_branch
        %561 = sbr.rel (%p559) target = $region64
      $region63: #{attnblock_forward.5} parent=11 // pred_region
        _
      $region64: #{attnblock_forward.5} parent=11 // pred_fallthru
        _
      // Predicated region
      $region65: #{attnblock_forward.5} parent=11 // pred_check
        %p562 = pneg %p377
      $region66: #{attnblock_forward.5} parent=11 // pred_check_branch
        %564 = sbr.rel (%p562) target = $region68
      $region67: #{attnblock_forward.5} parent=11 // pred_region
        _
      $region68: #{attnblock_forward.5} parent=11 // pred_fallthru
        _
      // Predicated region
      $region69: #{attnblock_forward.5} parent=11 // pred_check
        %p565 = pneg %p398
      $region70: #{attnblock_forward.5} parent=11 // pred_check_branch
        %567 = sbr.rel (%p565) target = $region72
      $region71: #{attnblock_forward.5} parent=11 // pred_region
        _
      $region72: #{attnblock_forward.5} parent=11 // pred_fallthru
        _
      // Predicated region
      $region73: #{attnblock_forward.5} parent=11 // pred_check
        %p568 = pneg %p419
      $region74: #{attnblock_forward.5} parent=11 // pred_check_branch
        %570 = sbr.rel (%p568) target = $region76
      $region75: #{attnblock_forward.5} parent=11 // pred_region
        _
      $region76: #{attnblock_forward.5} parent=11 // pred_fallthru
        _
      // Predicated region
      $region77: #{attnblock_forward.5} parent=11 // pred_check
        %p571 = pneg %p440
      $region78: #{attnblock_forward.5} parent=11 // pred_check_branch
        %573 = sbr.rel (%p571) target = $region80
      $region79: #{attnblock_forward.5} parent=11 // pred_region
        _
      $region80: #{attnblock_forward.5} parent=11 // pred_fallthru
        _
      // Predicated region
      $region81: #{attnblock_forward.5} parent=11 // pred_check
        %p574 = pneg %p461
      $region82: #{attnblock_forward.5} parent=11 // pred_check_branch
        %576 = sbr.rel (%p574) target = $region84
      $region83: #{attnblock_forward.5} parent=11 // pred_region
        _
      $region84: #{attnblock_forward.5} parent=11 // pred_fallthru
        _
      // Predicated region
      $region85: #{attnblock_forward.5} parent=11 // pred_check
        %p577 = pneg %p482
      $region86: #{attnblock_forward.5} parent=11 // pred_check_branch
        %579 = sbr.rel (%p577) target = $region88
      $region87: #{attnblock_forward.5} parent=11 // pred_region
        _
      $region88: #{attnblock_forward.5} parent=11 // pred_fallthru
        _
    $region12: #{attnblock_forward.5} parent=5 // pred_fallthru
      _
    %p580 = scmp.lt.s32.totalorder %s31, 2
    // Predicated region
    $region89: #{attnblock_forward.5} parent=5 // pred_check
      %p581 = pneg %p580
    $region90: #{attnblock_forward.5} parent=5 // pred_check_branch
      %583 = sbr.rel (%p581) target = $region92
    $region91: #{attnblock_forward.5} parent=5 // pred_region
      // Predicated region
      $region93: #{attnblock_forward.5} parent=91 // pred_check
        %p584 = pneg %p51
      $region94: #{attnblock_forward.5} parent=91 // pred_check_branch
        %586 = sbr.rel (%p584) target = $region96
      $region95: #{attnblock_forward.5} parent=91 // pred_region
        %p587 = scmp.lt.s32.totalorder %s31, 1
        %s588 = scalar_select %p587, %s31, 1
        %s589 = smul.addr %s588, 10
        %s590 = smul.addr %s589, 4
        %s591 = scalar_lea.vmem %s0, %s590
      $region96: #{attnblock_forward.5} parent=91 // pred_fallthru
        _
      // Predicated region
      $region97: #{attnblock_forward.5} parent=91 // pred_check
        %p592 = pneg %p77
      $region98: #{attnblock_forward.5} parent=91 // pred_check_branch
        %594 = sbr.rel (%p592) target = $region100
      $region99: #{attnblock_forward.5} parent=91 // pred_region
        %p595 = scmp.lt.s32.totalorder %s31, 1
        %s596 = scalar_select %p595, %s31, 1
        %s597 = smul.addr %s596, 2
        %s598 = smul.addr %s597, 2
        %s599 = scalar_lea.vmem %s1, %s598
      $region100: #{attnblock_forward.5} parent=91 // pred_fallthru
        _
    $region92: #{attnblock_forward.5} parent=5 // pred_fallthru
      _
    %p600 = scmp.le.s32.totalorder 1, %s31
    %p601 = scmp.lt.s32.totalorder %s31, 3
    %p602 = pnand %p600, %p601
    %p603 = pneg %p602
    // Predicated region
    $region101: #{attnblock_forward.5} parent=5 // pred_check
      _
    $region102: #{attnblock_forward.5} parent=5 // pred_check_branch
      %605 = sbr.rel (%p602) target = $region104
    $region103: #{attnblock_forward.5} parent=5 // pred_region
      %s606 = ssub.s32 %s31, 1
      %p607 = scmp.lt.s32.totalorder %s36, 1
      %s608 = scalar_select %p607, %s36, 1
      %s609 = smul.addr %s608, 10
      %s610 = smul.addr %s609, 4
      %s611 = scalar_lea.vmem %s0, %s610
      %p612 = pneg %p57
      %p613 = pneg %p54
      %p614 = scmp.lt.s32.totalorder %s36, 1
      %s615 = scalar_select %p614, %s36, 1
      %s616 = smul.addr %s615, 2
      %s617 = smul.addr %s616, 2
      %s618 = scalar_lea.vmem %s1, %s617
      %p619 = pneg %p83
      %p620 = pneg %p80
      %p621 = pneg %p104
      %p622 = pneg %p101
      %p623 = pneg %p125
      %p624 = pneg %p122
      %p625 = pneg %p146
      %p626 = pneg %p143
      %p627 = pneg %p167
      %p628 = pneg %p164
      %p629 = pneg %p188
      %p630 = pneg %p185
      %p631 = pneg %p209
      %p632 = pneg %p206
      %p633 = pneg %p230
      %p634 = pneg %p227
      %p635 = pneg %p251
      %p636 = pneg %p248
      %p637 = pneg %p272
      %p638 = pneg %p269
      %p639 = pneg %p293
      %p640 = pneg %p290
      %p641 = pneg %p314
      %p642 = pneg %p311
      %p643 = pneg %p335
      %p644 = pneg %p332
      %p645 = pneg %p356
      %p646 = pneg %p353
      %p647 = pneg %p377
      %p648 = pneg %p374
      %p649 = pneg %p398
      %p650 = pneg %p395
      %p651 = pneg %p419
      %p652 = pneg %p416
      %p653 = pneg %p440
      %p654 = pneg %p437
      %p655 = pneg %p461
      %p656 = pneg %p458
      %p657 = pneg %p482
      %p658 = pneg %p479
      %p659 = pneg %p508
      %p660 = pneg %p505
      %p661 = scmp.lt.s32.totalorder %s36, 1
      %s662 = scalar_select %p661, %s36, 1
      %s663 = smul.addr %s662, 2
      %s664 = smul.addr %s663, 4
      %s665 = scalar_lea.vmem %s21, %s664
      %p666 = scmp.lt.s32.totalorder %s36, 1
      %s667 = scalar_select %p666, %s36, 1
      %s668 = smul.addr %s667, 10
      %s669 = smul.addr %s668, 4
      %s670 = scalar_lea.vmem %s0, %s669
      %p671 = scmp.lt.s32.totalorder %s36, 1
      %s672 = scalar_select %p671, %s36, 1
      %s673 = smul.addr %s672, 2
      %s674 = smul.addr %s673, 2
      %s675 = scalar_lea.vmem %s1, %s674
      %p676 = scmp.lt.s32.totalorder %s36, 1
      %s677 = scalar_select %p676, %s36, 1
      %s678 = smul.addr %s677, 2
      %s679 = smul.addr %s678, 4
      %s680 = scalar_lea.vmem %s21, %s679
      %v682 = vld [vmem:[%s2] sm:$0x3]
      %v683 = vld [vmem:[%s670] sm:$0xff]
      %v684 = vld [vmem:[%s670 + $0x8] sm:$0xff]
      %v685 = vld [vmem:[%s670 + $0x10] sm:$0xff]
      %v686 = vld [vmem:[%s670 + $0x18] sm:$0xff]
      %v687 = vld [vmem:[%s670 + $0x20] sm:$0x33]
      %v693 = vunpack.c.l.b16 %v683
      %v694 = vunpack.c.h.b16 %v683
      %v695 = vunpack.c.l.b16 %v684
      %v696 = vunpack.c.h.b16 %v684
      %v697 = vunpack.c.l.b16 %v685
      %v698 = vunpack.c.h.b16 %v685
      %v699 = vunpack.c.l.b16 %v686
      %v700 = vunpack.c.h.b16 %v686
      %v701 = vunpack.c.l.b16 %v687
      %v702 = vunpack.c.h.b16 %v687
      %v703 = vpack.c.b16 %v695, %v693
      %v704 = vpack.c.b16 %v696, %v694
      %v705 = vpack.c.b16 %v699, %v697
      %v706 = vpack.c.b16 %v700, %v698
      %v707 = vpack.c.b16 %v701, %v701
      %v708 = vpack.c.b16 %v702, %v702
      %vm713 = vcmask 293888
      %v715 = vsel %vm713, %v682, 0
      %vm717 = vcmask 1041408
      %v719 = vsel %vm717, %v707, 0
      %v722 = vsel %vm717, %v708, 0
      %724 = vmatpush.bf16.msra.mxu0 0
      %725 = vmatpush.bf16.msra.mxu0 0
      %726 = vmatpush.bf16.msra.mxu0 0
      %727 = vmatpush.bf16.msra.mxu0 0
      %728 = vmatpush.bf16.msra.mxu0 0
      %729 = vmatpush.bf16.msra.mxu0 %v719
      %730 = vmatpush.bf16.msra.mxu0 %v705
      %731 = vmatpush.bf16.msra.mxu0 %v703
      %732 = vmatmul.bf16.gmra.mxu0 %v715
      %v733 = vpop.f32.mrf.mxu0
      %v734 = vadd.f32 0.0, %v733
      %v735 = vpop.f32.mrf.mxu0
      %736 = vdwg.mxu0
      %737 = vmatpush.bf16.msra.mxu0 0
      %738 = vmatpush.bf16.msra.mxu0 0
      %739 = vmatpush.bf16.msra.mxu0 0
      %740 = vmatpush.bf16.msra.mxu0 0
      %741 = vmatpush.bf16.msra.mxu0 0
      %742 = vmatpush.bf16.msra.mxu0 %v722
      %743 = vmatpush.bf16.msra.mxu0 %v706
      %744 = vmatpush.bf16.msra.mxu0 %v704
      %745 = vmatmul.bf16.gmra.mxu0 %v715
      %v746 = vpop.f32.mrf.mxu0
      %v747 = vadd.f32 0.0, %v746
      %v748 = vpop.f32.mrf.mxu0
      %749 = vdwg.mxu0
      %v750 = vld [vmem:[%s3] sm:$0xf]
      %752 = vset.pattern.permute.xlu0 0
      %753 = vperm.xlu0 %752, %v750
      %v754 = vpop.permute.xlu0 %753
      %v756 = vmul.f32 %v734, %v754
      %v757 = vmul.f32 %v747, %v754
      %v758 = vld [vmem:[%s4] sm:$0xf]
      %760 = vset.pattern.permute.xlu0 0
      %761 = vperm.xlu0 %760, %v758
      %v762 = vpop.permute.xlu0 %761
      %v764 = vadd.f32 %v756, %v762
      %v765 = vadd.f32 %v757, %v762
      %v766 = vmax.f32 %v764, 0.0
      %v767 = vmax.f32 %v765, 0.0
      %v768 = vld [vmem:[%s675] sm:$0xf]
      %v769 = vunpack.c.l.bf16 %v768
      %v772 = vrot.slane %v767, 4
      %vm773 = vcmask 1043456
      %v774 = vsel %vm773, %v766, %v772
      %v776 = vadd.f32 %v769, %v774
      %778 = vst [vmem:[#allocation1] ss:$2 sm:$0xff] %v776
      %v779 = vld.sshfl [vmem:[#allocation1] sm:$0xff pattern:$0x75316420]
      %v780 = vld.sshfl [vmem:[#allocation1 + $0x8] sm:$0xff pattern:$0x75316420]
      %v783 = vsel %vm773, %v779, 0.0
      %v784 = vsel %vm773, %v780, 0.0
      %v785 = vadd.f32 %v783, %v784
      %786 = vadd.xlane.f32.xlu0 %v785
      %v787 = vpop.xlane.xlu0 %786
      %v788 = vrcp.pop 256.0
      %v789 = vmul.f32 256.0, %v788
      %v790 = vsub.f32 1.0, %v789
      %v791 = vmul.f32 %v788, %v790
      %v792 = vadd.f32 %v788, %v791
      %vm793 = vweird.f32 %v788
      %v794 = vsel %vm793, %v788, %v792
      %v795 = vmul.f32 %v787, %v794
      %v796 = vld [vmem:[%s5] sm:$0x3]
      %v797 = vld [vmem:[%s6] sm:$0x3]
      %vm798 = vcmask 31744
      %v800 = vsel %vm798, %v796, 0
      %v803 = vsel %vm773, %v795, 0
      %805 = vmatpush.msra.mxu0 0.0
      %806 = vmatpush.msra.mxu0 0.0
      %807 = vmatpush.msra.mxu0 0.0
      %808 = vmatpush.msra.mxu0 0.0
      %809 = vmatpush.msra.mxu0 0.0
      %810 = vmatpush.msra.mxu0 0.0
      %811 = vmatpush.msra.mxu0 0.0
      %812 = vmatpush.msra.mxu0 0.0
      %813 = vmatpush.msra.mxu0 0.0
      %814 = vmatpush.msra.mxu0 0.0
      %815 = vmatpush.msra.mxu0 0.0
      %816 = vmatpush.msra.mxu0 0.0
      %817 = vmatpush.msra.mxu0 0.0
      %818 = vmatpush.msra.mxu0 0.0
      %819 = vmatpush.msra.mxu0 0.0
      %820 = vmatpush.msra.mxu0 %v803
      %821 = vmatmul.f32.gmra.mxu0 %v800
      %v822 = vpop.f32.mrf.mxu0
      %v823 = vadd.f32 %v797, %v822
      %824 = vdwg.mxu0
      %v825 = vmax.f32 %v823, 0.0
      %v826 = vld [vmem:[%s7] sm:$0xf]
      %v827 = vld [vmem:[%s8] sm:$0xf]
      %vm828 = vcmask 15360
      %v830 = vsel %vm828, %v826, 0
      %v833 = vsel %vm717, %v825, 0
      %835 = vmatpush.msra.mxu0 0.0
      %836 = vmatpush.msra.mxu0 0.0
      %837 = vmatpush.msra.mxu0 0.0
      %838 = vmatpush.msra.mxu0 0.0
      %839 = vmatpush.msra.mxu0 0.0
      %840 = vmatpush.msra.mxu0 0.0
      %841 = vmatpush.msra.mxu0 0.0
      %842 = vmatpush.msra.mxu0 0.0
      %843 = vmatpush.msra.mxu0 0.0
      %844 = vmatpush.msra.mxu0 0.0
      %845 = vmatpush.msra.mxu0 0.0
      %846 = vmatpush.msra.mxu0 0.0
      %847 = vmatpush.msra.mxu0 0.0
      %848 = vmatpush.msra.mxu0 0.0
      %849 = vmatpush.msra.mxu0 0.0
      %850 = vmatpush.msra.mxu0 %v833
      %851 = vmatmul.f32.gmra.mxu0 %v830
      %v852 = vpop.f32.mrf.mxu0
      %v853 = vadd.f32 %v827, %v852
      %854 = vdwg.mxu0
      %v855 = vxor.u32 %v853, 2147483648
      %v856 = vmul.f32 %v855, 1.442695
      %v857 = vpow.pop %v856
      %v858 = vadd.f32 %v857, 1.0
      %v859 = vrcp.pop %v858
      %v860 = vmul.f32 %v858, %v859
      %v861 = vsub.f32 1.0, %v860
      %v862 = vmul.f32 %v859, %v861
      %v863 = vadd.f32 %v859, %v862
      %vm864 = vweird.f32 %v858
      %vm865 = vweird.f32 %v859
      %vm866 = vmor %vm864, %vm865
      %v867 = vsel %vm866, %v859, %v863
      %v868 = vand.u32 2147483647, %v858
      %vm869 = vcmp.eq.f32.partialorder %v868, 8.507059e+37
      %v870 = vand.u32 %v858, 2147483648
      %v871 = vor.u32 1.1754944e-38, %v870
      %v872 = vsel %vm869, %v871, %v867
      %v873 = vmul.f32 1.0, %v872
      %875 = vset.pattern.permute.xlu0 0
      %876 = vperm.xlu0 %875, %v873
      %v877 = vpop.permute.xlu0 %876
      %v879 = vunpack.c.l.s4 839922192
      %v880 = vunpack.c.0.s8 %v879
      %v881 = vperm.slane %v877, %v880
      %v883 = vmul.f32 %v776, %v881
      %884 = vst [vmem:[#allocation1] ss:$2 sm:$0xff] %v776
      %v885 = vld.sshfl [vmem:[#allocation1] sm:$0xff pattern:$0x75316420]
      %v886 = vld.sshfl [vmem:[#allocation1 + $0x8] sm:$0xff pattern:$0x75316420]
      %v889 = vpack.c.bf16 %v885, %v885
      %v890 = vpack.c.bf16 %v886, %v886
      %v891 = vld [vmem:[%s9] sm:$0x3]
      %v893 = vsel %vm798, %v891, 0
      %v896 = vsel %vm717, %v889, 0
      %v899 = vsel %vm717, %v890, 0
      %901 = vmatpush.bf16.msra.mxu0 0
      %902 = vmatpush.bf16.msra.mxu0 0
      %903 = vmatpush.bf16.msra.mxu0 0
      %904 = vmatpush.bf16.msra.mxu0 0
      %905 = vmatpush.bf16.msra.mxu0 0
      %906 = vmatpush.bf16.msra.mxu0 0
      %907 = vmatpush.bf16.msra.mxu0 0
      %908 = vmatpush.bf16.msra.mxu0 %v896
      %909 = vmatmul.bf16.gmra.mxu0 %v893
      %v910 = vpop.f32.mrf.mxu0
      %v911 = vadd.f32 0.0, %v910
      %v912 = vpop.f32.mrf.mxu0
      %913 = vdwg.mxu0
      %914 = vmatpush.bf16.msra.mxu0 0
      %915 = vmatpush.bf16.msra.mxu0 0
      %916 = vmatpush.bf16.msra.mxu0 0
      %917 = vmatpush.bf16.msra.mxu0 0
      %918 = vmatpush.bf16.msra.mxu0 0
      %919 = vmatpush.bf16.msra.mxu0 0
      %920 = vmatpush.bf16.msra.mxu0 0
      %921 = vmatpush.bf16.msra.mxu0 %v899
      %922 = vmatmul.bf16.gmra.mxu0 %v893
      %v923 = vpop.f32.mrf.mxu0
      %v924 = vadd.f32 0.0, %v923
      %v925 = vpop.f32.mrf.mxu0
      %926 = vdwg.mxu0
      %v927 = vld [vmem:[%s10] sm:$0xf]
      %929 = vset.pattern.permute.xlu0 0
      %930 = vperm.xlu0 %929, %v927
      %v931 = vpop.permute.xlu0 %930
      %v933 = vmul.f32 %v911, %v931
      %v934 = vmul.f32 %v924, %v931
      %v935 = vld [vmem:[%s11] sm:$0xf]
      %937 = vset.pattern.permute.xlu0 0
      %938 = vperm.xlu0 %937, %v935
      %v939 = vpop.permute.xlu0 %938
      %v941 = vadd.f32 %v933, %v939
      %v942 = vadd.f32 %v934, %v939
      %v943 = vld [vmem:[%s12] sm:$0x3]
      %945 = vset.pattern.permute.xlu0 0
      %946 = vperm.xlu0 %945, %v943
      %v947 = vpop.permute.xlu0 %946
      %v949 = vmul.f32 %v941, %v947
      %v950 = vmul.f32 %v942, %v947
      %v951 = vsel %vm717, %v949, 0.0
      %v952 = vrot.slane %v951, 4
      %v953 = vadd.f32 %v951, %v952
      %v954 = vrot.slane %v953, 2
      %v955 = vadd.f32 %v953, %v954
      %v956 = vrot.slane %v955, 1
      %v957 = vadd.f32 %v955, %v956
      %v958 = vsel %vm717, %v950, 0.0
      %v959 = vrot.slane %v958, 4
      %v960 = vadd.f32 %v958, %v959
      %v961 = vrot.slane %v960, 2
      %v962 = vadd.f32 %v960, %v961
      %v963 = vrot.slane %v962, 1
      %v964 = vadd.f32 %v962, %v963
      %v965 = vld [vmem:[#allocation2] sm:$0x1]
      %967 = vset.pattern.permute.xlu0 0
      %968 = vperm.xlu0 %967, %v965
      %v969 = vpop.permute.xlu0 %968
      %v971 = vperm.slane %v969, 0
      %v972 = vmul.f32 %v957, %v971
      %v973 = vmul.f32 %v964, %v971
      %v974 = vld [vmem:[#allocation3] sm:$0x1]
      %976 = vset.pattern.permute.xlu0 0
      %977 = vperm.xlu0 %976, %v974
      %v978 = vpop.permute.xlu0 %977
      %v980 = vperm.slane %v978, 0
      %v981 = vadd.f32 %v972, %v980
      %v982 = vadd.f32 %v973, %v980
      %v983 = vld [vmem:[%s15] sm:$0x1]
      %985 = vst [vmem:[#allocation1] ss:$2 sm:$0xff] %v883
      %v986 = vld.sshfl [vmem:[#allocation1] sm:$0xff pattern:$0x75316420]
      %v987 = vld.sshfl [vmem:[#allocation1 + $0x8] sm:$0xff pattern:$0x75316420]
      %v990 = vpack.c.bf16 %v986, %v986
      %v991 = vpack.c.bf16 %v987, %v987
      %v993 = vsel %vm798, %v983, 0
      %v996 = vsel %vm717, %v990, 0
      %v999 = vsel %vm717, %v991, 0
      %1001 = vmatpush.bf16.msra.mxu0 0
      %1002 = vmatpush.bf16.msra.mxu0 0
      %1003 = vmatpush.bf16.msra.mxu0 0
      %1004 = vmatpush.bf16.msra.mxu0 0
      %1005 = vmatpush.bf16.msra.mxu0 0
      %1006 = vmatpush.bf16.msra.mxu0 0
      %1007 = vmatpush.bf16.msra.mxu0 0
      %1008 = vmatpush.bf16.msra.mxu0 %v996
      %1009 = vmatmul.bf16.gmra.mxu0 %v993
      %v1010 = vpop.f32.mrf.mxu0
      %v1011 = vadd.f32 0.0, %v1010
      %v1012 = vpop.f32.mrf.mxu0
      %1013 = vdwg.mxu0
      %1014 = vmatpush.bf16.msra.mxu0 0
      %1015 = vmatpush.bf16.msra.mxu0 0
      %1016 = vmatpush.bf16.msra.mxu0 0
      %1017 = vmatpush.bf16.msra.mxu0 0
      %1018 = vmatpush.bf16.msra.mxu0 0
      %1019 = vmatpush.bf16.msra.mxu0 0
      %1020 = vmatpush.bf16.msra.mxu0 0
      %1021 = vmatpush.bf16.msra.mxu0 %v999
      %1022 = vmatmul.bf16.gmra.mxu0 %v993
      %v1023 = vpop.f32.mrf.mxu0
      %v1024 = vadd.f32 0.0, %v1023
      %v1025 = vpop.f32.mrf.mxu0
      %1026 = vdwg.mxu0
      %v1027 = vld [vmem:[%s16] sm:$0x3]
      %1029 = vset.pattern.permute.xlu0 0
      %1030 = vperm.xlu0 %1029, %v1027
      %v1031 = vpop.permute.xlu0 %1030
      %v1033 = vmul.f32 %v1011, %v1031
      %v1034 = vmul.f32 %v1024, %v1031
      %v1035 = vld [vmem:[%s17] sm:$0x3]
      %1037 = vset.pattern.permute.xlu0 0
      %1038 = vperm.xlu0 %1037, %v1035
      %v1039 = vpop.permute.xlu0 %1038
      %v1041 = vadd.f32 %v1033, %v1039
      %v1042 = vadd.f32 %v1034, %v1039
      %v1043 = vmul.f32 %v981, %v941
      %v1044 = vmul.f32 %v982, %v942
      %v1047 = vrot.slane %v1041, 6
      %v1048 = vrot.slane %v1042, 6
      %v1051 = vadd.f32 %v1043, %v1047
      %v1052 = vadd.f32 %v1044, %v1048
      %v1053 = vld [vmem:[%s18] sm:$0x3]
      %v1054 = vpack.c.bf16 %v1051, %v1051
      %v1055 = vpack.c.bf16 %v1052, %v1052
      %v1058 = vrot.slane %v1054, 1
      %v1059 = vrot.slane %v1055, 1
      %v1061 = vsel %vm828, %v1053, 0
      %vm1063 = vcmask 1040384
      %v1065 = vsel %vm1063, %v1058, 0
      %v1068 = vsel %vm1063, %v1059, 0
      %1070 = vmatpush.bf16.msra.mxu0 0
      %1071 = vmatpush.bf16.msra.mxu0 0
      %1072 = vmatpush.bf16.msra.mxu0 0
      %1073 = vmatpush.bf16.msra.mxu0 0
      %1074 = vmatpush.bf16.msra.mxu0 0
      %1075 = vmatpush.bf16.msra.mxu0 0
      %1076 = vmatpush.bf16.msra.mxu0 0
      %1077 = vmatpush.bf16.msra.mxu0 %v1065
      %1078 = vmatmul.bf16.gmra.mxu0 %v1061
      %v1079 = vpop.f32.mrf.mxu0
      %v1080 = vadd.f32 0.0, %v1079
      %v1081 = vpop.f32.mrf.mxu0
      %1082 = vdwg.mxu0
      %1083 = vmatpush.bf16.msra.mxu0 0
      %1084 = vmatpush.bf16.msra.mxu0 0
      %1085 = vmatpush.bf16.msra.mxu0 0
      %1086 = vmatpush.bf16.msra.mxu0 0
      %1087 = vmatpush.bf16.msra.mxu0 0
      %1088 = vmatpush.bf16.msra.mxu0 0
      %1089 = vmatpush.bf16.msra.mxu0 0
      %1090 = vmatpush.bf16.msra.mxu0 %v1068
      %1091 = vmatmul.bf16.gmra.mxu0 %v1061
      %v1092 = vpop.f32.mrf.mxu0
      %v1093 = vadd.f32 0.0, %v1092
      %v1094 = vpop.f32.mrf.mxu0
      %1095 = vdwg.mxu0
      %v1096 = vld [vmem:[%s19] sm:$0xf]
      %1098 = vset.pattern.permute.xlu0 0
      %1099 = vperm.xlu0 %1098, %v1096
      %v1100 = vpop.permute.xlu0 %1099
      %v1102 = vmul.f32 %v1080, %v1100
      %v1103 = vmul.f32 %v1093, %v1100
      %v1104 = vld [vmem:[%s20] sm:$0xf]
      %1106 = vset.pattern.permute.xlu0 0
      %1107 = vperm.xlu0 %1106, %v1104
      %v1108 = vpop.permute.xlu0 %1107
      %v1110 = vadd.f32 %v1102, %v1108
      %v1111 = vadd.f32 %v1103, %v1108
      %v1112 = vmax.f32 %v1110, 0.0
      %v1113 = vmax.f32 %v1111, 0.0
      %v1116 = vrot.slane %v1113, 4
      %v1117 = vsel %vm773, %v1112, %v1116
      %1119 = vst [vmem:[%s680] sm:$0xff] %v1117
      %p1120 = scmp.lt.s32.totalorder %s36, 1
      %s1121 = scalar_select %p1120, %s36, 1
      %s1122 = smul.addr %s1121, 2
      %s1123 = smul.addr %s1122, 4
      %s1124 = scalar_lea.vmem %s21, %s1123
      // Predicated region
      $region105: #{attnblock_forward.5} parent=103 // pred_check
        %p1125 = pneg %p505
      $region106: #{attnblock_forward.5} parent=103 // pred_check_branch
        %1127 = sbr.rel (%p1125) target = $region108
      $region107: #{attnblock_forward.5} parent=103 // pred_region
        _
      $region108: #{attnblock_forward.5} parent=103 // pred_fallthru
        _
    $region104: #{attnblock_forward.5} parent=5 // pred_fallthru
      _
    %p1128 = scmp.le.s32.totalorder 2, %s31
    // Predicated region
    $region109: #{attnblock_forward.5} parent=5 // pred_check
      %p1129 = pneg %p1128
    $region110: #{attnblock_forward.5} parent=5 // pred_check_branch
      %1131 = sbr.rel (%p1129) target = $region112
    $region111: #{attnblock_forward.5} parent=5 // pred_region
      %s1132 = ssub.s32 %s31, 2
      // Predicated region
      $region113: #{attnblock_forward.5} parent=111 // pred_check
        %p1133 = pneg %p511
      $region114: #{attnblock_forward.5} parent=111 // pred_check_branch
        %1135 = sbr.rel (%p1133) target = $region116
      $region115: #{attnblock_forward.5} parent=111 // pred_region
        %p1136 = scmp.lt.s32.totalorder %s37, 1
        %s1137 = scalar_select %p1136, %s37, 1
        %s1138 = smul.addr %s1137, 2
        %s1139 = smul.addr %s1138, 4
        %s1140 = scalar_lea.vmem %s21, %s1139
      $region116: #{attnblock_forward.5} parent=111 // pred_fallthru
        _
    $region112: #{attnblock_forward.5} parent=5 // pred_fallthru
      _
  $region6: #{attnblock_forward.5} parent=0 // loop_footer
    %s35 = sadd.s32 1, %s31
  $region7: #{attnblock_forward.5} parent=0 // loop_footer_branch
    %30 = sbr.rel target = $region3
  $region8: #{attnblock_forward.5} parent=0 // loop_exit
    _

</llo_original>
